<compile_context>
chip_gen: v5e
topology: v5e:2x2
jax: 0.10.0
libtpu: 0.0.40
codegen_flags: <defaults>
</compile_context>

<pallas_src>
import functools

import jax
import jax.numpy as jnp
from jax.experimental import pallas as pl
from jax.experimental.pallas import tpu as pltpu

B = 8            # batch
STATE_DIM = 16
ACTION_DIM = 8
HIDDEN = 64
T_DIM = 16       # time-embedding dim
N_TIMESTEPS = 10
MAX_ACTION = 1.0


def _mish(x):
    # mish(x) = x * tanh(softplus(x)) = x * e(e+2) / (e(e+2) + 2), e = exp(x).
    # One EUP exp + one approx reciprocal; clamp the exp argument so e never
    # overflows (for x > 20, tanh(softplus(x)) == 1 to fp32 precision anyway).
    e = jnp.exp(jnp.minimum(x, 20.0))
    n = e * (e + 2.0)
    return x * n * pl.reciprocal(n + 2.0, approx=True)


def diffusion_kernel(coeffs_ref, state_ref, xinit_ref, noise_ref, temb_ref,
                     w1x_ref, w1s_ref, w2_ref, b2_ref, w3_ref, b3_ref,
                     w4_ref, b4_ref, out_ref, *, max_action, n_timesteps):
    b, a = out_ref.shape
    hid = w2_ref.shape[0]

    # ---- loop-invariant work, hoisted out of the unrolled timestep loop ----
    # state projection (identical for every timestep)
    s_proj = jnp.dot(state_ref[...], w1s_ref[...], preferred_element_type=jnp.float32)
    w1x = w1x_ref[...]
    w2 = w2_ref[...]
    w3 = w3_ref[...]
    w4 = w4_ref[...]
    # pre-broadcast biases once (JAX does not CSE broadcast_in_dim across the unroll)
    b2 = jnp.broadcast_to(b2_ref[...], (b, hid))
    b3 = jnp.broadcast_to(b3_ref[...], (b, hid))
    b4 = jnp.broadcast_to(b4_ref[...], (b, a))

    def step(g, x_t):
        # g walks reversed time: g = 0 <-> t = T-1 (all per-step tables pre-reversed).
        # ---- epsilon-prediction MLP ----
        # layer 1 = x_t@w1x + state@w1s + (t_emb@w1t + b1); last two terms hoisted.
        te = temb_ref[pl.ds(g, 1), :]                         # [1, hid], broadcasts
        h = jnp.dot(x_t, w1x, preferred_element_type=jnp.float32) + s_proj + te
        h = _mish(h)
        h = _mish(jnp.dot(h, w2, preferred_element_type=jnp.float32) + b2)
        h = _mish(jnp.dot(h, w3, preferred_element_type=jnp.float32) + b3)
        eps = jnp.dot(h, w4, preferred_element_type=jnp.float32) + b4

        # ---- per-timestep scalar coefficients (flat SMEM table, 5 per step) ----
        base = g * 5
        c_sqrt_recip   = coeffs_ref[base + 0]   # sqrt(1/alphas_cumprod[t])
        c_sqrt_recipm1 = coeffs_ref[base + 1]   # sqrt(1/alphas_cumprod[t] - 1)
        c_mean1        = coeffs_ref[base + 2]   # posterior_mean_coef1[t]
        c_mean2        = coeffs_ref[base + 3]   # posterior_mean_coef2[t]
        c_noise_scale  = coeffs_ref[base + 4]   # nonzero_mask * exp(0.5*post_logvar[t])

        # predict_start_from_noise (predict_epsilon=True) + clip_denoised
        x_recon = jnp.clip(c_sqrt_recip * x_t - c_sqrt_recipm1 * eps,
                           -max_action, max_action)
        # q_posterior mean + p_sample noise injection
        model_mean = c_mean1 * x_recon + c_mean2 * x_t
        return model_mean + c_noise_scale * noise_ref[g]

    x_final = jax.lax.fori_loop(0, n_timesteps, step, xinit_ref[...], unroll=True)

    # final clamp from Diffusion.sample()
    out_ref[...] = jnp.clip(x_final, -max_action, max_action)


def diffusion_sample(params, state, x_init, noise_seq, max_action=MAX_ACTION):
    T = noise_seq.shape[0]
    b, a = x_init.shape

    # ---- precomputation in plain JAX (runs once, not per timestep) ----
    coeffs = make_coeffs(T)                                   # [T, 5]
    temb = time_mlp(params, T)                                # [T, T_DIM]
    # fuse time-embedding projection + layer-1 bias into one [T, HIDDEN] table
    temb_tbl = temb @ params['w1t'] + params['b1']            # [T, HIDDEN]

    rev = jnp.arange(T - 1, -1, -1)                           # t = T-1, ..., 0
    coeffs_rev = coeffs[rev].reshape(-1)                      # flat [T*5] for SMEM
    temb_rev = temb_tbl[rev]                                  # [T, HIDDEN]
    noise_rev = noise_seq[rev]                                # [T, B, A]

    vmem = pl.BlockSpec(memory_space=pltpu.MemorySpace.VMEM)
    smem = pl.BlockSpec(memory_space=pltpu.MemorySpace.SMEM)

    kernel = functools.partial(diffusion_kernel,
                               max_action=max_action, n_timesteps=T)
    return pl.pallas_call(
        kernel,
        out_shape=jax.ShapeDtypeStruct((b, a), jnp.float32),
        in_specs=[
            smem,   # coeffs_rev [T*5] scalar table
            vmem,   # state      [B, S]
            vmem,   # x_init     [B, A]
            vmem,   # noise_rev  [T, B, A]
            vmem,   # temb_rev   [T, HIDDEN]  (t_emb@w1t + b1)
            vmem,   # w1x
            vmem,   # w1s
            vmem, vmem,   # w2, b2
            vmem, vmem,   # w3, b3
            vmem, vmem,   # w4, b4
        ],
        out_specs=pl.BlockSpec(memory_space=pltpu.MemorySpace.VMEM),
    )(coeffs_rev, state, x_init, noise_rev, temb_rev,
      params['w1x'], params['w1s'],
      params['w2'], params['b2'], params['w3'], params['b3'],
      params['w4'], params['b4'])


def make_coeffs(T, beta_start=1e-4, beta_end=0.02):
    """linear beta schedule + derived per-timestep scalars, packed as [T, 5]."""
    betas = jnp.linspace(beta_start, beta_end, T).astype(jnp.float32)
    alphas = 1.0 - betas
    ac = jnp.cumprod(alphas)
    ac_prev = jnp.concatenate([jnp.ones((1,), jnp.float32), ac[:-1]])
    sqrt_recip = jnp.sqrt(1.0 / ac)
    sqrt_recipm1 = jnp.sqrt(1.0 / ac - 1.0)
    post_var = betas * (1.0 - ac_prev) / (1.0 - ac)
    post_logvar = jnp.log(jnp.clip(post_var, 1e-20, None))
    coef1 = betas * jnp.sqrt(ac_prev) / (1.0 - ac)
    coef2 = (1.0 - ac_prev) * jnp.sqrt(alphas) / (1.0 - ac)
    nonzero = (jnp.arange(T) != 0).astype(jnp.float32)
    # exact rewrite of p_sample's nonzero_mask * exp(0.5 * log_var) as one scalar/step
    noise_scale = nonzero * jnp.exp(0.5 * post_logvar)
    return jnp.stack([sqrt_recip, sqrt_recipm1, coef1, coef2, noise_scale], axis=1)


def _softplus_mish(x):
    # reference-form mish for the plain-JAX time MLP (not perf critical)
    return x * jnp.tanh(jax.nn.softplus(x))


def init_params(key):
    ks = jax.random.split(key, 8)

    def dense(k, fan_in, fan_out):
        return (jax.random.normal(k, (fan_in, fan_out), jnp.float32)
                / jnp.sqrt(jnp.float32(fan_in)))

    return {
        # time-embedding MLP (runs in plain JAX; depends only on t)
        'wt1': dense(ks[0], T_DIM, 2 * T_DIM),
        'bt1': jnp.zeros((1, 2 * T_DIM), jnp.float32),
        'wt2': dense(ks[1], 2 * T_DIM, T_DIM),
        'bt2': jnp.zeros((1, T_DIM), jnp.float32),
        # epsilon-prediction MLP (runs inside the Pallas kernel); the first layer's
        # concat([x, t_emb, state]) @ W1 is decomposed into w1x / w1t / w1s blocks.
        'w1x': dense(ks[2], ACTION_DIM, HIDDEN),
        'w1t': dense(ks[3], T_DIM, HIDDEN),
        'w1s': dense(ks[4], STATE_DIM, HIDDEN),
        'b1': jnp.zeros((1, HIDDEN), jnp.float32),
        'w2': dense(ks[5], HIDDEN, HIDDEN),
        'b2': jnp.zeros((1, HIDDEN), jnp.float32),
        'w3': dense(ks[6], HIDDEN, HIDDEN),
        'b3': jnp.zeros((1, HIDDEN), jnp.float32),
        'w4': dense(ks[7], HIDDEN, ACTION_DIM),
        'b4': jnp.zeros((1, ACTION_DIM), jnp.float32),
    }


def time_mlp(params, T):
    """Sinusoidal positional embedding + small MLP, precomputed for all T timesteps."""
    t = jnp.arange(T, dtype=jnp.float32)
    half = T_DIM // 2
    freqs = jnp.exp(-jnp.log(10000.0) * jnp.arange(half, dtype=jnp.float32) / (half - 1))
    args = t[:, None] * freqs[None, :]
    emb = jnp.concatenate([jnp.sin(args), jnp.cos(args)], axis=-1)      # [T, T_DIM]
    h = _softplus_mish(emb @ params['wt1'] + params['bt1'])
    return h @ params['wt2'] + params['bt2']                            # [T, T_DIM]


if __name__ == "__main__":
    key = jax.random.PRNGKey(0)
    kp, ks, kx, kn = jax.random.split(key, 4)

    params = init_params(kp)
    state = jax.random.normal(ks, (B, STATE_DIM), jnp.float32)
    x_init = jax.random.normal(kx, (B, ACTION_DIM), jnp.float32)          # torch.randn(shape)
    noise_seq = jax.random.normal(kn, (N_TIMESTEPS, B, ACTION_DIM), jnp.float32)  # randn_like per step
    # TODO(synk): torch's RNG stream (torch.randn) cannot be reproduced bit-exactly in JAX;
    # deterministic jax.random draws are used instead.

    action = diffusion_sample(params, state, x_init, noise_seq)
    action = jax.block_until_ready(action)

    assert action.shape == (B, ACTION_DIM)
    assert bool(jnp.all(jnp.isfinite(action)))
    assert bool(jnp.all(jnp.abs(action) <= MAX_ACTION + 1e-6))
    print("KERNEL_OK")
</pallas_src>

<mosaic_0001>
module attributes {stable_mosaic.version = 11 : i64} {
  func.func @diffusion_kernel(%arg0: memref<50xf32, #tpu.memory_space<smem>>, %arg1: memref<8x16xf32, #tpu.memory_space<vmem>>, %arg2: memref<8x8xf32, #tpu.memory_space<vmem>>, %arg3: memref<10x8x8xf32, #tpu.memory_space<vmem>>, %arg4: memref<10x64xf32, #tpu.memory_space<vmem>>, %arg5: memref<8x64xf32, #tpu.memory_space<vmem>>, %arg6: memref<16x64xf32, #tpu.memory_space<vmem>>, %arg7: memref<64x64xf32, #tpu.memory_space<vmem>>, %arg8: memref<1x64xf32, #tpu.memory_space<vmem>>, %arg9: memref<64x64xf32, #tpu.memory_space<vmem>>, %arg10: memref<1x64xf32, #tpu.memory_space<vmem>>, %arg11: memref<64x8xf32, #tpu.memory_space<vmem>>, %arg12: memref<1x8xf32, #tpu.memory_space<vmem>>, %arg13: memref<8x8xf32, #tpu.memory_space<vmem>>) attributes {dimension_semantics = [], scalar_prefetch = 0 : i64, scratch_operands = 0 : i64, tpu.core_type = #tpu.core_type<tc>} {
    %c0 = arith.constant 0 : index
    %c0_0 = arith.constant 0 : index
    %0 = vector.load %arg1[%c0, %c0_0] : memref<8x16xf32, #tpu.memory_space<vmem>>, vector<8x16xf32>
    %c0_1 = arith.constant 0 : index
    %c0_2 = arith.constant 0 : index
    %1 = vector.load %arg6[%c0_1, %c0_2] : memref<16x64xf32, #tpu.memory_space<vmem>>, vector<16x64xf32>
    %cst = arith.constant dense<0.000000e+00> : vector<8x64xf32>
    %2 = tpu.matmul %0, %1, %cst {dimension_numbers = #tpu.dot_dimension_numbers<[1], [0], [0], [1], [0, 0, 1, 1], [], []>} : vector<8x16xf32>, vector<16x64xf32>, vector<8x64xf32> -> vector<8x64xf32>
    %c0_3 = arith.constant 0 : index
    %c0_4 = arith.constant 0 : index
    %3 = vector.load %arg5[%c0_3, %c0_4] : memref<8x64xf32, #tpu.memory_space<vmem>>, vector<8x64xf32>
    %c0_5 = arith.constant 0 : index
    %c0_6 = arith.constant 0 : index
    %4 = vector.load %arg7[%c0_5, %c0_6] : memref<64x64xf32, #tpu.memory_space<vmem>>, vector<64x64xf32>
    %c0_7 = arith.constant 0 : index
    %c0_8 = arith.constant 0 : index
    %5 = vector.load %arg9[%c0_7, %c0_8] : memref<64x64xf32, #tpu.memory_space<vmem>>, vector<64x64xf32>
    %c0_9 = arith.constant 0 : index
    %c0_10 = arith.constant 0 : index
    %6 = vector.load %arg11[%c0_9, %c0_10] : memref<64x8xf32, #tpu.memory_space<vmem>>, vector<64x8xf32>
    %c0_11 = arith.constant 0 : index
    %c0_12 = arith.constant 0 : index
    %7 = vector.load %arg8[%c0_11, %c0_12] : memref<1x64xf32, #tpu.memory_space<vmem>>, vector<1x64xf32>
    %8 = vector.shape_cast %7 : vector<1x64xf32> to vector<1x64xf32>
    %9 = vector.broadcast %8 : vector<1x64xf32> to vector<8x64xf32>
    %c0_13 = arith.constant 0 : index
    %c0_14 = arith.constant 0 : index
    %10 = vector.load %arg10[%c0_13, %c0_14] : memref<1x64xf32, #tpu.memory_space<vmem>>, vector<1x64xf32>
    %11 = vector.shape_cast %10 : vector<1x64xf32> to vector<1x64xf32>
    %12 = vector.broadcast %11 : vector<1x64xf32> to vector<8x64xf32>
    %c0_15 = arith.constant 0 : index
    %c0_16 = arith.constant 0 : index
    %13 = vector.load %arg12[%c0_15, %c0_16] : memref<1x8xf32, #tpu.memory_space<vmem>>, vector<1x8xf32>
    %14 = vector.shape_cast %13 : vector<1x8xf32> to vector<1x8xf32>
    %15 = vector.broadcast %14 : vector<1x8xf32> to vector<8x8xf32>
    %c0_17 = arith.constant 0 : index
    %c0_18 = arith.constant 0 : index
    %16 = vector.load %arg2[%c0_17, %c0_18] : memref<8x8xf32, #tpu.memory_space<vmem>>, vector<8x8xf32>
    %c0_i32 = arith.constant 0 : i32
    %17 = arith.index_cast %c0_i32 : i32 to index
    %c0_19 = arith.constant 0 : index
    %18 = vector.load %arg4[%17, %c0_19] : memref<10x64xf32, #tpu.memory_space<vmem>>, vector<1x64xf32>
    %cst_20 = arith.constant dense<0.000000e+00> : vector<8x64xf32>
    %19 = tpu.matmul %16, %3, %cst_20 {dimension_numbers = #tpu.dot_dimension_numbers<[1], [0], [0], [1], [0, 0, 1, 1], [], []>} : vector<8x8xf32>, vector<8x64xf32>, vector<8x64xf32> -> vector<8x64xf32>
    %20 = arith.addf %19, %2 : vector<8x64xf32>
    %21 = vector.broadcast %18 : vector<1x64xf32> to vector<8x64xf32>
    %22 = arith.addf %20, %21 : vector<8x64xf32>
    %cst_21 = arith.constant 2.000000e+01 : f32
    %23 = vector.broadcast %cst_21 : f32 to vector<8x64xf32>
    %24 = arith.minimumf %22, %23 : vector<8x64xf32>
    %25 = math.exp %24 : vector<8x64xf32>
    %cst_22 = arith.constant 2.000000e+00 : f32
    %26 = vector.broadcast %cst_22 : f32 to vector<8x64xf32>
    %27 = arith.addf %25, %26 : vector<8x64xf32>
    %28 = arith.mulf %25, %27 : vector<8x64xf32>
    %29 = arith.mulf %22, %28 : vector<8x64xf32>
    %cst_23 = arith.constant 2.000000e+00 : f32
    %30 = vector.broadcast %cst_23 : f32 to vector<8x64xf32>
    %31 = arith.addf %28, %30 : vector<8x64xf32>
    %32 = tpu.reciprocal %31 {approx = true} : vector<8x64xf32> -> vector<8x64xf32>
    %33 = arith.mulf %29, %32 : vector<8x64xf32>
    %cst_24 = arith.constant dense<0.000000e+00> : vector<8x64xf32>
    %34 = tpu.matmul %33, %4, %cst_24 {dimension_numbers = #tpu.dot_dimension_numbers<[1], [0], [0], [1], [0, 0, 1, 1], [], []>} : vector<8x64xf32>, vector<64x64xf32>, vector<8x64xf32> -> vector<8x64xf32>
    %35 = arith.addf %34, %9 : vector<8x64xf32>
    %cst_25 = arith.constant 2.000000e+01 : f32
    %36 = vector.broadcast %cst_25 : f32 to vector<8x64xf32>
    %37 = arith.minimumf %35, %36 : vector<8x64xf32>
    %38 = math.exp %37 : vector<8x64xf32>
    %cst_26 = arith.constant 2.000000e+00 : f32
    %39 = vector.broadcast %cst_26 : f32 to vector<8x64xf32>
    %40 = arith.addf %38, %39 : vector<8x64xf32>
    %41 = arith.mulf %38, %40 : vector<8x64xf32>
    %42 = arith.mulf %35, %41 : vector<8x64xf32>
    %cst_27 = arith.constant 2.000000e+00 : f32
    %43 = vector.broadcast %cst_27 : f32 to vector<8x64xf32>
    %44 = arith.addf %41, %43 : vector<8x64xf32>
    %45 = tpu.reciprocal %44 {approx = true} : vector<8x64xf32> -> vector<8x64xf32>
    %46 = arith.mulf %42, %45 : vector<8x64xf32>
    %cst_28 = arith.constant dense<0.000000e+00> : vector<8x64xf32>
    %47 = tpu.matmul %46, %5, %cst_28 {dimension_numbers = #tpu.dot_dimension_numbers<[1], [0], [0], [1], [0, 0, 1, 1], [], []>} : vector<8x64xf32>, vector<64x64xf32>, vector<8x64xf32> -> vector<8x64xf32>
    %48 = arith.addf %47, %12 : vector<8x64xf32>
    %cst_29 = arith.constant 2.000000e+01 : f32
    %49 = vector.broadcast %cst_29 : f32 to vector<8x64xf32>
    %50 = arith.minimumf %48, %49 : vector<8x64xf32>
    %51 = math.exp %50 : vector<8x64xf32>
    %cst_30 = arith.constant 2.000000e+00 : f32
    %52 = vector.broadcast %cst_30 : f32 to vector<8x64xf32>
    %53 = arith.addf %51, %52 : vector<8x64xf32>
    %54 = arith.mulf %51, %53 : vector<8x64xf32>
    %55 = arith.mulf %48, %54 : vector<8x64xf32>
    %cst_31 = arith.constant 2.000000e+00 : f32
    %56 = vector.broadcast %cst_31 : f32 to vector<8x64xf32>
    %57 = arith.addf %54, %56 : vector<8x64xf32>
    %58 = tpu.reciprocal %57 {approx = true} : vector<8x64xf32> -> vector<8x64xf32>
    %59 = arith.mulf %55, %58 : vector<8x64xf32>
    %cst_32 = arith.constant dense<0.000000e+00> : vector<8x8xf32>
    %60 = tpu.matmul %59, %6, %cst_32 {dimension_numbers = #tpu.dot_dimension_numbers<[1], [0], [0], [1], [0, 0, 1, 1], [], []>} : vector<8x64xf32>, vector<64x8xf32>, vector<8x8xf32> -> vector<8x8xf32>
    %61 = arith.addf %60, %15 : vector<8x8xf32>
    %c5_i32 = arith.constant 5 : i32
    %62 = arith.muli %c0_i32, %c5_i32 : i32
    %c0_i32_33 = arith.constant 0 : i32
    %63 = arith.addi %62, %c0_i32_33 : i32
    %64 = arith.index_cast %63 : i32 to index
    %65 = memref.load %arg0[%64] : memref<50xf32, #tpu.memory_space<smem>>
    %c1_i32 = arith.constant 1 : i32
    %66 = arith.addi %62, %c1_i32 : i32
    %67 = arith.index_cast %66 : i32 to index
    %68 = memref.load %arg0[%67] : memref<50xf32, #tpu.memory_space<smem>>
    %c2_i32 = arith.constant 2 : i32
    %69 = arith.addi %62, %c2_i32 : i32
    %70 = arith.index_cast %69 : i32 to index
    %71 = memref.load %arg0[%70] : memref<50xf32, #tpu.memory_space<smem>>
    %c3_i32 = arith.constant 3 : i32
    %72 = arith.addi %62, %c3_i32 : i32
    %73 = arith.index_cast %72 : i32 to index
    %74 = memref.load %arg0[%73] : memref<50xf32, #tpu.memory_space<smem>>
    %c4_i32 = arith.constant 4 : i32
    %75 = arith.addi %62, %c4_i32 : i32
    %76 = arith.index_cast %75 : i32 to index
    %77 = memref.load %arg0[%76] : memref<50xf32, #tpu.memory_space<smem>>
    %78 = vector.broadcast %65 : f32 to vector<8x8xf32>
    %79 = arith.mulf %78, %16 : vector<8x8xf32>
    %80 = vector.broadcast %68 : f32 to vector<8x8xf32>
    %81 = arith.mulf %80, %61 : vector<8x8xf32>
    %82 = arith.subf %79, %81 : vector<8x8xf32>
    %cst_34 = arith.constant -1.000000e+00 : f32
    %cst_35 = arith.constant 1.000000e+00 : f32
    %83 = vector.broadcast %cst_34 : f32 to vector<8x8xf32>
    %84 = arith.maximumf %83, %82 : vector<8x8xf32>
    %85 = vector.broadcast %cst_35 : f32 to vector<8x8xf32>
    %86 = arith.minimumf %85, %84 : vector<8x8xf32>
    %87 = vector.broadcast %71 : f32 to vector<8x8xf32>
    %88 = arith.mulf %87, %86 : vector<8x8xf32>
    %89 = vector.broadcast %74 : f32 to vector<8x8xf32>
    %90 = arith.mulf %89, %16 : vector<8x8xf32>
    %91 = arith.addf %88, %90 : vector<8x8xf32>
    %92 = arith.index_cast %c0_i32 : i32 to index
    %c0_36 = arith.constant 0 : index
    %c0_37 = arith.constant 0 : index
    %93 = vector.load %arg3[%92, %c0_36, %c0_37] : memref<10x8x8xf32, #tpu.memory_space<vmem>>, vector<1x8x8xf32>
    %94 = vector.shape_cast %93 : vector<1x8x8xf32> to vector<8x8xf32>
    %95 = vector.broadcast %77 : f32 to vector<8x8xf32>
    %96 = arith.mulf %95, %94 : vector<8x8xf32>
    %97 = arith.addf %91, %96 : vector<8x8xf32>
    %c1_i32_38 = arith.constant 1 : i32
    %98 = arith.index_cast %c1_i32_38 : i32 to index
    %c0_39 = arith.constant 0 : index
    %99 = vector.load %arg4[%98, %c0_39] : memref<10x64xf32, #tpu.memory_space<vmem>>, vector<1x64xf32>
    %cst_40 = arith.constant dense<0.000000e+00> : vector<8x64xf32>
    %100 = tpu.matmul %97, %3, %cst_40 {dimension_numbers = #tpu.dot_dimension_numbers<[1], [0], [0], [1], [0, 0, 1, 1], [], []>} : vector<8x8xf32>, vector<8x64xf32>, vector<8x64xf32> -> vector<8x64xf32>
    %101 = arith.addf %100, %2 : vector<8x64xf32>
    %102 = vector.broadcast %99 : vector<1x64xf32> to vector<8x64xf32>
    %103 = arith.addf %101, %102 : vector<8x64xf32>
    %cst_41 = arith.constant 2.000000e+01 : f32
    %104 = vector.broadcast %cst_41 : f32 to vector<8x64xf32>
    %105 = arith.minimumf %103, %104 : vector<8x64xf32>
    %106 = math.exp %105 : vector<8x64xf32>
    %cst_42 = arith.constant 2.000000e+00 : f32
    %107 = vector.broadcast %cst_42 : f32 to vector<8x64xf32>
    %108 = arith.addf %106, %107 : vector<8x64xf32>
    %109 = arith.mulf %106, %108 : vector<8x64xf32>
    %110 = arith.mulf %103, %109 : vector<8x64xf32>
    %cst_43 = arith.constant 2.000000e+00 : f32
    %111 = vector.broadcast %cst_43 : f32 to vector<8x64xf32>
    %112 = arith.addf %109, %111 : vector<8x64xf32>
    %113 = tpu.reciprocal %112 {approx = true} : vector<8x64xf32> -> vector<8x64xf32>
    %114 = arith.mulf %110, %113 : vector<8x64xf32>
    %cst_44 = arith.constant dense<0.000000e+00> : vector<8x64xf32>
    %115 = tpu.matmul %114, %4, %cst_44 {dimension_numbers = #tpu.dot_dimension_numbers<[1], [0], [0], [1], [0, 0, 1, 1], [], []>} : vector<8x64xf32>, vector<64x64xf32>, vector<8x64xf32> -> vector<8x64xf32>
    %116 = arith.addf %115, %9 : vector<8x64xf32>
    %cst_45 = arith.constant 2.000000e+01 : f32
    %117 = vector.broadcast %cst_45 : f32 to vector<8x64xf32>
    %118 = arith.minimumf %116, %117 : vector<8x64xf32>
    %119 = math.exp %118 : vector<8x64xf32>
    %cst_46 = arith.constant 2.000000e+00 : f32
    %120 = vector.broadcast %cst_46 : f32 to vector<8x64xf32>
    %121 = arith.addf %119, %120 : vector<8x64xf32>
    %122 = arith.mulf %119, %121 : vector<8x64xf32>
    %123 = arith.mulf %116, %122 : vector<8x64xf32>
    %cst_47 = arith.constant 2.000000e+00 : f32
    %124 = vector.broadcast %cst_47 : f32 to vector<8x64xf32>
    %125 = arith.addf %122, %124 : vector<8x64xf32>
    %126 = tpu.reciprocal %125 {approx = true} : vector<8x64xf32> -> vector<8x64xf32>
    %127 = arith.mulf %123, %126 : vector<8x64xf32>
    %cst_48 = arith.constant dense<0.000000e+00> : vector<8x64xf32>
    %128 = tpu.matmul %127, %5, %cst_48 {dimension_numbers = #tpu.dot_dimension_numbers<[1], [0], [0], [1], [0, 0, 1, 1], [], []>} : vector<8x64xf32>, vector<64x64xf32>, vector<8x64xf32> -> vector<8x64xf32>
    %129 = arith.addf %128, %12 : vector<8x64xf32>
    %cst_49 = arith.constant 2.000000e+01 : f32
    %130 = vector.broadcast %cst_49 : f32 to vector<8x64xf32>
    %131 = arith.minimumf %129, %130 : vector<8x64xf32>
    %132 = math.exp %131 : vector<8x64xf32>
    %cst_50 = arith.constant 2.000000e+00 : f32
    %133 = vector.broadcast %cst_50 : f32 to vector<8x64xf32>
    %134 = arith.addf %132, %133 : vector<8x64xf32>
    %135 = arith.mulf %132, %134 : vector<8x64xf32>
    %136 = arith.mulf %129, %135 : vector<8x64xf32>
    %cst_51 = arith.constant 2.000000e+00 : f32
    %137 = vector.broadcast %cst_51 : f32 to vector<8x64xf32>
    %138 = arith.addf %135, %137 : vector<8x64xf32>
    %139 = tpu.reciprocal %138 {approx = true} : vector<8x64xf32> -> vector<8x64xf32>
    %140 = arith.mulf %136, %139 : vector<8x64xf32>
    %cst_52 = arith.constant dense<0.000000e+00> : vector<8x8xf32>
    %141 = tpu.matmul %140, %6, %cst_52 {dimension_numbers = #tpu.dot_dimension_numbers<[1], [0], [0], [1], [0, 0, 1, 1], [], []>} : vector<8x64xf32>, vector<64x8xf32>, vector<8x8xf32> -> vector<8x8xf32>
    %142 = arith.addf %141, %15 : vector<8x8xf32>
    %c5_i32_53 = arith.constant 5 : i32
    %143 = arith.muli %c1_i32_38, %c5_i32_53 : i32
    %c0_i32_54 = arith.constant 0 : i32
    %144 = arith.addi %143, %c0_i32_54 : i32
    %145 = arith.index_cast %144 : i32 to index
    %146 = memref.load %arg0[%145] : memref<50xf32, #tpu.memory_space<smem>>
    %c1_i32_55 = arith.constant 1 : i32
    %147 = arith.addi %143, %c1_i32_55 : i32
    %148 = arith.index_cast %147 : i32 to index
    %149 = memref.load %arg0[%148] : memref<50xf32, #tpu.memory_space<smem>>
    %c2_i32_56 = arith.constant 2 : i32
    %150 = arith.addi %143, %c2_i32_56 : i32
    %151 = arith.index_cast %150 : i32 to index
    %152 = memref.load %arg0[%151] : memref<50xf32, #tpu.memory_space<smem>>
    %c3_i32_57 = arith.constant 3 : i32
    %153 = arith.addi %143, %c3_i32_57 : i32
    %154 = arith.index_cast %153 : i32 to index
    %155 = memref.load %arg0[%154] : memref<50xf32, #tpu.memory_space<smem>>
    %c4_i32_58 = arith.constant 4 : i32
    %156 = arith.addi %143, %c4_i32_58 : i32
    %157 = arith.index_cast %156 : i32 to index
    %158 = memref.load %arg0[%157] : memref<50xf32, #tpu.memory_space<smem>>
    %159 = vector.broadcast %146 : f32 to vector<8x8xf32>
    %160 = arith.mulf %159, %97 : vector<8x8xf32>
    %161 = vector.broadcast %149 : f32 to vector<8x8xf32>
    %162 = arith.mulf %161, %142 : vector<8x8xf32>
    %163 = arith.subf %160, %162 : vector<8x8xf32>
    %cst_59 = arith.constant -1.000000e+00 : f32
    %cst_60 = arith.constant 1.000000e+00 : f32
    %164 = vector.broadcast %cst_59 : f32 to vector<8x8xf32>
    %165 = arith.maximumf %164, %163 : vector<8x8xf32>
    %166 = vector.broadcast %cst_60 : f32 to vector<8x8xf32>
    %167 = arith.minimumf %166, %165 : vector<8x8xf32>
    %168 = vector.broadcast %152 : f32 to vector<8x8xf32>
    %169 = arith.mulf %168, %167 : vector<8x8xf32>
    %170 = vector.broadcast %155 : f32 to vector<8x8xf32>
    %171 = arith.mulf %170, %97 : vector<8x8xf32>
    %172 = arith.addf %169, %171 : vector<8x8xf32>
    %173 = arith.index_cast %c1_i32_38 : i32 to index
    %c0_61 = arith.constant 0 : index
    %c0_62 = arith.constant 0 : index
    %174 = vector.load %arg3[%173, %c0_61, %c0_62] : memref<10x8x8xf32, #tpu.memory_space<vmem>>, vector<1x8x8xf32>
    %175 = vector.shape_cast %174 : vector<1x8x8xf32> to vector<8x8xf32>
    %176 = vector.broadcast %158 : f32 to vector<8x8xf32>
    %177 = arith.mulf %176, %175 : vector<8x8xf32>
    %178 = arith.addf %172, %177 : vector<8x8xf32>
    %c2_i32_63 = arith.constant 2 : i32
    %179 = arith.index_cast %c2_i32_63 : i32 to index
    %c0_64 = arith.constant 0 : index
    %180 = vector.load %arg4[%179, %c0_64] : memref<10x64xf32, #tpu.memory_space<vmem>>, vector<1x64xf32>
    %cst_65 = arith.constant dense<0.000000e+00> : vector<8x64xf32>
    %181 = tpu.matmul %178, %3, %cst_65 {dimension_numbers = #tpu.dot_dimension_numbers<[1], [0], [0], [1], [0, 0, 1, 1], [], []>} : vector<8x8xf32>, vector<8x64xf32>, vector<8x64xf32> -> vector<8x64xf32>
    %182 = arith.addf %181, %2 : vector<8x64xf32>
    %183 = vector.broadcast %180 : vector<1x64xf32> to vector<8x64xf32>
    %184 = arith.addf %182, %183 : vector<8x64xf32>
    %cst_66 = arith.constant 2.000000e+01 : f32
    %185 = vector.broadcast %cst_66 : f32 to vector<8x64xf32>
    %186 = arith.minimumf %184, %185 : vector<8x64xf32>
    %187 = math.exp %186 : vector<8x64xf32>
    %cst_67 = arith.constant 2.000000e+00 : f32
    %188 = vector.broadcast %cst_67 : f32 to vector<8x64xf32>
    %189 = arith.addf %187, %188 : vector<8x64xf32>
    %190 = arith.mulf %187, %189 : vector<8x64xf32>
    %191 = arith.mulf %184, %190 : vector<8x64xf32>
    %cst_68 = arith.constant 2.000000e+00 : f32
    %192 = vector.broadcast %cst_68 : f32 to vector<8x64xf32>
    %193 = arith.addf %190, %192 : vector<8x64xf32>
    %194 = tpu.reciprocal %193 {approx = true} : vector<8x64xf32> -> vector<8x64xf32>
    %195 = arith.mulf %191, %194 : vector<8x64xf32>
    %cst_69 = arith.constant dense<0.000000e+00> : vector<8x64xf32>
    %196 = tpu.matmul %195, %4, %cst_69 {dimension_numbers = #tpu.dot_dimension_numbers<[1], [0], [0], [1], [0, 0, 1, 1], [], []>} : vector<8x64xf32>, vector<64x64xf32>, vector<8x64xf32> -> vector<8x64xf32>
    %197 = arith.addf %196, %9 : vector<8x64xf32>
    %cst_70 = arith.constant 2.000000e+01 : f32
    %198 = vector.broadcast %cst_70 : f32 to vector<8x64xf32>
    %199 = arith.minimumf %197, %198 : vector<8x64xf32>
    %200 = math.exp %199 : vector<8x64xf32>
    %cst_71 = arith.constant 2.000000e+00 : f32
    %201 = vector.broadcast %cst_71 : f32 to vector<8x64xf32>
    %202 = arith.addf %200, %201 : vector<8x64xf32>
    %203 = arith.mulf %200, %202 : vector<8x64xf32>
    %204 = arith.mulf %197, %203 : vector<8x64xf32>
    %cst_72 = arith.constant 2.000000e+00 : f32
    %205 = vector.broadcast %cst_72 : f32 to vector<8x64xf32>
    %206 = arith.addf %203, %205 : vector<8x64xf32>
    %207 = tpu.reciprocal %206 {approx = true} : vector<8x64xf32> -> vector<8x64xf32>
    %208 = arith.mulf %204, %207 : vector<8x64xf32>
    %cst_73 = arith.constant dense<0.000000e+00> : vector<8x64xf32>
    %209 = tpu.matmul %208, %5, %cst_73 {dimension_numbers = #tpu.dot_dimension_numbers<[1], [0], [0], [1], [0, 0, 1, 1], [], []>} : vector<8x64xf32>, vector<64x64xf32>, vector<8x64xf32> -> vector<8x64xf32>
    %210 = arith.addf %209, %12 : vector<8x64xf32>
    %cst_74 = arith.constant 2.000000e+01 : f32
    %211 = vector.broadcast %cst_74 : f32 to vector<8x64xf32>
    %212 = arith.minimumf %210, %211 : vector<8x64xf32>
    %213 = math.exp %212 : vector<8x64xf32>
    %cst_75 = arith.constant 2.000000e+00 : f32
    %214 = vector.broadcast %cst_75 : f32 to vector<8x64xf32>
    %215 = arith.addf %213, %214 : vector<8x64xf32>
    %216 = arith.mulf %213, %215 : vector<8x64xf32>
    %217 = arith.mulf %210, %216 : vector<8x64xf32>
    %cst_76 = arith.constant 2.000000e+00 : f32
    %218 = vector.broadcast %cst_76 : f32 to vector<8x64xf32>
    %219 = arith.addf %216, %218 : vector<8x64xf32>
    %220 = tpu.reciprocal %219 {approx = true} : vector<8x64xf32> -> vector<8x64xf32>
    %221 = arith.mulf %217, %220 : vector<8x64xf32>
    %cst_77 = arith.constant dense<0.000000e+00> : vector<8x8xf32>
    %222 = tpu.matmul %221, %6, %cst_77 {dimension_numbers = #tpu.dot_dimension_numbers<[1], [0], [0], [1], [0, 0, 1, 1], [], []>} : vector<8x64xf32>, vector<64x8xf32>, vector<8x8xf32> -> vector<8x8xf32>
    %223 = arith.addf %222, %15 : vector<8x8xf32>
    %c5_i32_78 = arith.constant 5 : i32
    %224 = arith.muli %c2_i32_63, %c5_i32_78 : i32
    %c0_i32_79 = arith.constant 0 : i32
    %225 = arith.addi %224, %c0_i32_79 : i32
    %226 = arith.index_cast %225 : i32 to index
    %227 = memref.load %arg0[%226] : memref<50xf32, #tpu.memory_space<smem>>
    %c1_i32_80 = arith.constant 1 : i32
    %228 = arith.addi %224, %c1_i32_80 : i32
    %229 = arith.index_cast %228 : i32 to index
    %230 = memref.load %arg0[%229] : memref<50xf32, #tpu.memory_space<smem>>
    %c2_i32_81 = arith.constant 2 : i32
    %231 = arith.addi %224, %c2_i32_81 : i32
    %232 = arith.index_cast %231 : i32 to index
    %233 = memref.load %arg0[%232] : memref<50xf32, #tpu.memory_space<smem>>
    %c3_i32_82 = arith.constant 3 : i32
    %234 = arith.addi %224, %c3_i32_82 : i32
    %235 = arith.index_cast %234 : i32 to index
    %236 = memref.load %arg0[%235] : memref<50xf32, #tpu.memory_space<smem>>
    %c4_i32_83 = arith.constant 4 : i32
    %237 = arith.addi %224, %c4_i32_83 : i32
    %238 = arith.index_cast %237 : i32 to index
    %239 = memref.load %arg0[%238] : memref<50xf32, #tpu.memory_space<smem>>
    %240 = vector.broadcast %227 : f32 to vector<8x8xf32>
    %241 = arith.mulf %240, %178 : vector<8x8xf32>
    %242 = vector.broadcast %230 : f32 to vector<8x8xf32>
    %243 = arith.mulf %242, %223 : vector<8x8xf32>
    %244 = arith.subf %241, %243 : vector<8x8xf32>
    %cst_84 = arith.constant -1.000000e+00 : f32
    %cst_85 = arith.constant 1.000000e+00 : f32
    %245 = vector.broadcast %cst_84 : f32 to vector<8x8xf32>
    %246 = arith.maximumf %245, %244 : vector<8x8xf32>
    %247 = vector.broadcast %cst_85 : f32 to vector<8x8xf32>
    %248 = arith.minimumf %247, %246 : vector<8x8xf32>
    %249 = vector.broadcast %233 : f32 to vector<8x8xf32>
    %250 = arith.mulf %249, %248 : vector<8x8xf32>
    %251 = vector.broadcast %236 : f32 to vector<8x8xf32>
    %252 = arith.mulf %251, %178 : vector<8x8xf32>
    %253 = arith.addf %250, %252 : vector<8x8xf32>
    %254 = arith.index_cast %c2_i32_63 : i32 to index
    %c0_86 = arith.constant 0 : index
    %c0_87 = arith.constant 0 : index
    %255 = vector.load %arg3[%254, %c0_86, %c0_87] : memref<10x8x8xf32, #tpu.memory_space<vmem>>, vector<1x8x8xf32>
    %256 = vector.shape_cast %255 : vector<1x8x8xf32> to vector<8x8xf32>
    %257 = vector.broadcast %239 : f32 to vector<8x8xf32>
    %258 = arith.mulf %257, %256 : vector<8x8xf32>
    %259 = arith.addf %253, %258 : vector<8x8xf32>
    %c3_i32_88 = arith.constant 3 : i32
    %260 = arith.index_cast %c3_i32_88 : i32 to index
    %c0_89 = arith.constant 0 : index
    %261 = vector.load %arg4[%260, %c0_89] : memref<10x64xf32, #tpu.memory_space<vmem>>, vector<1x64xf32>
    %cst_90 = arith.constant dense<0.000000e+00> : vector<8x64xf32>
    %262 = tpu.matmul %259, %3, %cst_90 {dimension_numbers = #tpu.dot_dimension_numbers<[1], [0], [0], [1], [0, 0, 1, 1], [], []>} : vector<8x8xf32>, vector<8x64xf32>, vector<8x64xf32> -> vector<8x64xf32>
    %263 = arith.addf %262, %2 : vector<8x64xf32>
    %264 = vector.broadcast %261 : vector<1x64xf32> to vector<8x64xf32>
    %265 = arith.addf %263, %264 : vector<8x64xf32>
    %cst_91 = arith.constant 2.000000e+01 : f32
    %266 = vector.broadcast %cst_91 : f32 to vector<8x64xf32>
    %267 = arith.minimumf %265, %266 : vector<8x64xf32>
    %268 = math.exp %267 : vector<8x64xf32>
    %cst_92 = arith.constant 2.000000e+00 : f32
    %269 = vector.broadcast %cst_92 : f32 to vector<8x64xf32>
    %270 = arith.addf %268, %269 : vector<8x64xf32>
    %271 = arith.mulf %268, %270 : vector<8x64xf32>
    %272 = arith.mulf %265, %271 : vector<8x64xf32>
    %cst_93 = arith.constant 2.000000e+00 : f32
    %273 = vector.broadcast %cst_93 : f32 to vector<8x64xf32>
    %274 = arith.addf %271, %273 : vector<8x64xf32>
    %275 = tpu.reciprocal %274 {approx = true} : vector<8x64xf32> -> vector<8x64xf32>
    %276 = arith.mulf %272, %275 : vector<8x64xf32>
    %cst_94 = arith.constant dense<0.000000e+00> : vector<8x64xf32>
    %277 = tpu.matmul %276, %4, %cst_94 {dimension_numbers = #tpu.dot_dimension_numbers<[1], [0], [0], [1], [0, 0, 1, 1], [], []>} : vector<8x64xf32>, vector<64x64xf32>, vector<8x64xf32> -> vector<8x64xf32>
    %278 = arith.addf %277, %9 : vector<8x64xf32>
    %cst_95 = arith.constant 2.000000e+01 : f32
    %279 = vector.broadcast %cst_95 : f32 to vector<8x64xf32>
    %280 = arith.minimumf %278, %279 : vector<8x64xf32>
    %281 = math.exp %280 : vector<8x64xf32>
    %cst_96 = arith.constant 2.000000e+00 : f32
    %282 = vector.broadcast %cst_96 : f32 to vector<8x64xf32>
    %283 = arith.addf %281, %282 : vector<8x64xf32>
    %284 = arith.mulf %281, %283 : vector<8x64xf32>
    %285 = arith.mulf %278, %284 : vector<8x64xf32>
    %cst_97 = arith.constant 2.000000e+00 : f32
    %286 = vector.broadcast %cst_97 : f32 to vector<8x64xf32>
    %287 = arith.addf %284, %286 : vector<8x64xf32>
    %288 = tpu.reciprocal %287 {approx = true} : vector<8x64xf32> -> vector<8x64xf32>
    %289 = arith.mulf %285, %288 : vector<8x64xf32>
    %cst_98 = arith.constant dense<0.000000e+00> : vector<8x64xf32>
    %290 = tpu.matmul %289, %5, %cst_98 {dimension_numbers = #tpu.dot_dimension_numbers<[1], [0], [0], [1], [0, 0, 1, 1], [], []>} : vector<8x64xf32>, vector<64x64xf32>, vector<8x64xf32> -> vector<8x64xf32>
    %291 = arith.addf %290, %12 : vector<8x64xf32>
    %cst_99 = arith.constant 2.000000e+01 : f32
    %292 = vector.broadcast %cst_99 : f32 to vector<8x64xf32>
    %293 = arith.minimumf %291, %292 : vector<8x64xf32>
    %294 = math.exp %293 : vector<8x64xf32>
    %cst_100 = arith.constant 2.000000e+00 : f32
    %295 = vector.broadcast %cst_100 : f32 to vector<8x64xf32>
    %296 = arith.addf %294, %295 : vector<8x64xf32>
    %297 = arith.mulf %294, %296 : vector<8x64xf32>
    %298 = arith.mulf %291, %297 : vector<8x64xf32>
    %cst_101 = arith.constant 2.000000e+00 : f32
    %299 = vector.broadcast %cst_101 : f32 to vector<8x64xf32>
    %300 = arith.addf %297, %299 : vector<8x64xf32>
    %301 = tpu.reciprocal %300 {approx = true} : vector<8x64xf32> -> vector<8x64xf32>
    %302 = arith.mulf %298, %301 : vector<8x64xf32>
    %cst_102 = arith.constant dense<0.000000e+00> : vector<8x8xf32>
    %303 = tpu.matmul %302, %6, %cst_102 {dimension_numbers = #tpu.dot_dimension_numbers<[1], [0], [0], [1], [0, 0, 1, 1], [], []>} : vector<8x64xf32>, vector<64x8xf32>, vector<8x8xf32> -> vector<8x8xf32>
    %304 = arith.addf %303, %15 : vector<8x8xf32>
    %c5_i32_103 = arith.constant 5 : i32
    %305 = arith.muli %c3_i32_88, %c5_i32_103 : i32
    %c0_i32_104 = arith.constant 0 : i32
    %306 = arith.addi %305, %c0_i32_104 : i32
    %307 = arith.index_cast %306 : i32 to index
    %308 = memref.load %arg0[%307] : memref<50xf32, #tpu.memory_space<smem>>
    %c1_i32_105 = arith.constant 1 : i32
    %309 = arith.addi %305, %c1_i32_105 : i32
    %310 = arith.index_cast %309 : i32 to index
    %311 = memref.load %arg0[%310] : memref<50xf32, #tpu.memory_space<smem>>
    %c2_i32_106 = arith.constant 2 : i32
    %312 = arith.addi %305, %c2_i32_106 : i32
    %313 = arith.index_cast %312 : i32 to index
    %314 = memref.load %arg0[%313] : memref<50xf32, #tpu.memory_space<smem>>
    %c3_i32_107 = arith.constant 3 : i32
    %315 = arith.addi %305, %c3_i32_107 : i32
    %316 = arith.index_cast %315 : i32 to index
    %317 = memref.load %arg0[%316] : memref<50xf32, #tpu.memory_space<smem>>
    %c4_i32_108 = arith.constant 4 : i32
    %318 = arith.addi %305, %c4_i32_108 : i32
    %319 = arith.index_cast %318 : i32 to index
    %320 = memref.load %arg0[%319] : memref<50xf32, #tpu.memory_space<smem>>
    %321 = vector.broadcast %308 : f32 to vector<8x8xf32>
    %322 = arith.mulf %321, %259 : vector<8x8xf32>
    %323 = vector.broadcast %311 : f32 to vector<8x8xf32>
    %324 = arith.mulf %323, %304 : vector<8x8xf32>
    %325 = arith.subf %322, %324 : vector<8x8xf32>
    %cst_109 = arith.constant -1.000000e+00 : f32
    %cst_110 = arith.constant 1.000000e+00 : f32
    %326 = vector.broadcast %cst_109 : f32 to vector<8x8xf32>
    %327 = arith.maximumf %326, %325 : vector<8x8xf32>
    %328 = vector.broadcast %cst_110 : f32 to vector<8x8xf32>
    %329 = arith.minimumf %328, %327 : vector<8x8xf32>
    %330 = vector.broadcast %314 : f32 to vector<8x8xf32>
    %331 = arith.mulf %330, %329 : vector<8x8xf32>
    %332 = vector.broadcast %317 : f32 to vector<8x8xf32>
    %333 = arith.mulf %332, %259 : vector<8x8xf32>
    %334 = arith.addf %331, %333 : vector<8x8xf32>
    %335 = arith.index_cast %c3_i32_88 : i32 to index
    %c0_111 = arith.constant 0 : index
    %c0_112 = arith.constant 0 : index
    %336 = vector.load %arg3[%335, %c0_111, %c0_112] : memref<10x8x8xf32, #tpu.memory_space<vmem>>, vector<1x8x8xf32>
    %337 = vector.shape_cast %336 : vector<1x8x8xf32> to vector<8x8xf32>
    %338 = vector.broadcast %320 : f32 to vector<8x8xf32>
    %339 = arith.mulf %338, %337 : vector<8x8xf32>
    %340 = arith.addf %334, %339 : vector<8x8xf32>
    %c4_i32_113 = arith.constant 4 : i32
    %341 = arith.index_cast %c4_i32_113 : i32 to index
    %c0_114 = arith.constant 0 : index
    %342 = vector.load %arg4[%341, %c0_114] : memref<10x64xf32, #tpu.memory_space<vmem>>, vector<1x64xf32>
    %cst_115 = arith.constant dense<0.000000e+00> : vector<8x64xf32>
    %343 = tpu.matmul %340, %3, %cst_115 {dimension_numbers = #tpu.dot_dimension_numbers<[1], [0], [0], [1], [0, 0, 1, 1], [], []>} : vector<8x8xf32>, vector<8x64xf32>, vector<8x64xf32> -> vector<8x64xf32>
    %344 = arith.addf %343, %2 : vector<8x64xf32>
    %345 = vector.broadcast %342 : vector<1x64xf32> to vector<8x64xf32>
    %346 = arith.addf %344, %345 : vector<8x64xf32>
    %cst_116 = arith.constant 2.000000e+01 : f32
    %347 = vector.broadcast %cst_116 : f32 to vector<8x64xf32>
    %348 = arith.minimumf %346, %347 : vector<8x64xf32>
    %349 = math.exp %348 : vector<8x64xf32>
    %cst_117 = arith.constant 2.000000e+00 : f32
    %350 = vector.broadcast %cst_117 : f32 to vector<8x64xf32>
    %351 = arith.addf %349, %350 : vector<8x64xf32>
    %352 = arith.mulf %349, %351 : vector<8x64xf32>
    %353 = arith.mulf %346, %352 : vector<8x64xf32>
    %cst_118 = arith.constant 2.000000e+00 : f32
    %354 = vector.broadcast %cst_118 : f32 to vector<8x64xf32>
    %355 = arith.addf %352, %354 : vector<8x64xf32>
    %356 = tpu.reciprocal %355 {approx = true} : vector<8x64xf32> -> vector<8x64xf32>
    %357 = arith.mulf %353, %356 : vector<8x64xf32>
    %cst_119 = arith.constant dense<0.000000e+00> : vector<8x64xf32>
    %358 = tpu.matmul %357, %4, %cst_119 {dimension_numbers = #tpu.dot_dimension_numbers<[1], [0], [0], [1], [0, 0, 1, 1], [], []>} : vector<8x64xf32>, vector<64x64xf32>, vector<8x64xf32> -> vector<8x64xf32>
    %359 = arith.addf %358, %9 : vector<8x64xf32>
    %cst_120 = arith.constant 2.000000e+01 : f32
    %360 = vector.broadcast %cst_120 : f32 to vector<8x64xf32>
    %361 = arith.minimumf %359, %360 : vector<8x64xf32>
    %362 = math.exp %361 : vector<8x64xf32>
    %cst_121 = arith.constant 2.000000e+00 : f32
    %363 = vector.broadcast %cst_121 : f32 to vector<8x64xf32>
    %364 = arith.addf %362, %363 : vector<8x64xf32>
    %365 = arith.mulf %362, %364 : vector<8x64xf32>
    %366 = arith.mulf %359, %365 : vector<8x64xf32>
    %cst_122 = arith.constant 2.000000e+00 : f32
    %367 = vector.broadcast %cst_122 : f32 to vector<8x64xf32>
    %368 = arith.addf %365, %367 : vector<8x64xf32>
    %369 = tpu.reciprocal %368 {approx = true} : vector<8x64xf32> -> vector<8x64xf32>
    %370 = arith.mulf %366, %369 : vector<8x64xf32>
    %cst_123 = arith.constant dense<0.000000e+00> : vector<8x64xf32>
    %371 = tpu.matmul %370, %5, %cst_123 {dimension_numbers = #tpu.dot_dimension_numbers<[1], [0], [0], [1], [0, 0, 1, 1], [], []>} : vector<8x64xf32>, vector<64x64xf32>, vector<8x64xf32> -> vector<8x64xf32>
    %372 = arith.addf %371, %12 : vector<8x64xf32>
    %cst_124 = arith.constant 2.000000e+01 : f32
    %373 = vector.broadcast %cst_124 : f32 to vector<8x64xf32>
    %374 = arith.minimumf %372, %373 : vector<8x64xf32>
    %375 = math.exp %374 : vector<8x64xf32>
    %cst_125 = arith.constant 2.000000e+00 : f32
    %376 = vector.broadcast %cst_125 : f32 to vector<8x64xf32>
    %377 = arith.addf %375, %376 : vector<8x64xf32>
    %378 = arith.mulf %375, %377 : vector<8x64xf32>
    %379 = arith.mulf %372, %378 : vector<8x64xf32>
    %cst_126 = arith.constant 2.000000e+00 : f32
    %380 = vector.broadcast %cst_126 : f32 to vector<8x64xf32>
    %381 = arith.addf %378, %380 : vector<8x64xf32>
    %382 = tpu.reciprocal %381 {approx = true} : vector<8x64xf32> -> vector<8x64xf32>
    %383 = arith.mulf %379, %382 : vector<8x64xf32>
    %cst_127 = arith.constant dense<0.000000e+00> : vector<8x8xf32>
    %384 = tpu.matmul %383, %6, %cst_127 {dimension_numbers = #tpu.dot_dimension_numbers<[1], [0], [0], [1], [0, 0, 1, 1], [], []>} : vector<8x64xf32>, vector<64x8xf32>, vector<8x8xf32> -> vector<8x8xf32>
    %385 = arith.addf %384, %15 : vector<8x8xf32>
    %c5_i32_128 = arith.constant 5 : i32
    %386 = arith.muli %c4_i32_113, %c5_i32_128 : i32
    %c0_i32_129 = arith.constant 0 : i32
    %387 = arith.addi %386, %c0_i32_129 : i32
    %388 = arith.index_cast %387 : i32 to index
    %389 = memref.load %arg0[%388] : memref<50xf32, #tpu.memory_space<smem>>
    %c1_i32_130 = arith.constant 1 : i32
    %390 = arith.addi %386, %c1_i32_130 : i32
    %391 = arith.index_cast %390 : i32 to index
    %392 = memref.load %arg0[%391] : memref<50xf32, #tpu.memory_space<smem>>
    %c2_i32_131 = arith.constant 2 : i32
    %393 = arith.addi %386, %c2_i32_131 : i32
    %394 = arith.index_cast %393 : i32 to index
    %395 = memref.load %arg0[%394] : memref<50xf32, #tpu.memory_space<smem>>
    %c3_i32_132 = arith.constant 3 : i32
    %396 = arith.addi %386, %c3_i32_132 : i32
    %397 = arith.index_cast %396 : i32 to index
    %398 = memref.load %arg0[%397] : memref<50xf32, #tpu.memory_space<smem>>
    %c4_i32_133 = arith.constant 4 : i32
    %399 = arith.addi %386, %c4_i32_133 : i32
    %400 = arith.index_cast %399 : i32 to index
    %401 = memref.load %arg0[%400] : memref<50xf32, #tpu.memory_space<smem>>
    %402 = vector.broadcast %389 : f32 to vector<8x8xf32>
    %403 = arith.mulf %402, %340 : vector<8x8xf32>
    %404 = vector.broadcast %392 : f32 to vector<8x8xf32>
    %405 = arith.mulf %404, %385 : vector<8x8xf32>
    %406 = arith.subf %403, %405 : vector<8x8xf32>
    %cst_134 = arith.constant -1.000000e+00 : f32
    %cst_135 = arith.constant 1.000000e+00 : f32
    %407 = vector.broadcast %cst_134 : f32 to vector<8x8xf32>
    %408 = arith.maximumf %407, %406 : vector<8x8xf32>
    %409 = vector.broadcast %cst_135 : f32 to vector<8x8xf32>
    %410 = arith.minimumf %409, %408 : vector<8x8xf32>
    %411 = vector.broadcast %395 : f32 to vector<8x8xf32>
    %412 = arith.mulf %411, %410 : vector<8x8xf32>
    %413 = vector.broadcast %398 : f32 to vector<8x8xf32>
    %414 = arith.mulf %413, %340 : vector<8x8xf32>
    %415 = arith.addf %412, %414 : vector<8x8xf32>
    %416 = arith.index_cast %c4_i32_113 : i32 to index
    %c0_136 = arith.constant 0 : index
    %c0_137 = arith.constant 0 : index
    %417 = vector.load %arg3[%416, %c0_136, %c0_137] : memref<10x8x8xf32, #tpu.memory_space<vmem>>, vector<1x8x8xf32>
    %418 = vector.shape_cast %417 : vector<1x8x8xf32> to vector<8x8xf32>
    %419 = vector.broadcast %401 : f32 to vector<8x8xf32>
    %420 = arith.mulf %419, %418 : vector<8x8xf32>
    %421 = arith.addf %415, %420 : vector<8x8xf32>
    %c5_i32_138 = arith.constant 5 : i32
    %422 = arith.index_cast %c5_i32_138 : i32 to index
    %c0_139 = arith.constant 0 : index
    %423 = vector.load %arg4[%422, %c0_139] : memref<10x64xf32, #tpu.memory_space<vmem>>, vector<1x64xf32>
    %cst_140 = arith.constant dense<0.000000e+00> : vector<8x64xf32>
    %424 = tpu.matmul %421, %3, %cst_140 {dimension_numbers = #tpu.dot_dimension_numbers<[1], [0], [0], [1], [0, 0, 1, 1], [], []>} : vector<8x8xf32>, vector<8x64xf32>, vector<8x64xf32> -> vector<8x64xf32>
    %425 = arith.addf %424, %2 : vector<8x64xf32>
    %426 = vector.broadcast %423 : vector<1x64xf32> to vector<8x64xf32>
    %427 = arith.addf %425, %426 : vector<8x64xf32>
    %cst_141 = arith.constant 2.000000e+01 : f32
    %428 = vector.broadcast %cst_141 : f32 to vector<8x64xf32>
    %429 = arith.minimumf %427, %428 : vector<8x64xf32>
    %430 = math.exp %429 : vector<8x64xf32>
    %cst_142 = arith.constant 2.000000e+00 : f32
    %431 = vector.broadcast %cst_142 : f32 to vector<8x64xf32>
    %432 = arith.addf %430, %431 : vector<8x64xf32>
    %433 = arith.mulf %430, %432 : vector<8x64xf32>
    %434 = arith.mulf %427, %433 : vector<8x64xf32>
    %cst_143 = arith.constant 2.000000e+00 : f32
    %435 = vector.broadcast %cst_143 : f32 to vector<8x64xf32>
    %436 = arith.addf %433, %435 : vector<8x64xf32>
    %437 = tpu.reciprocal %436 {approx = true} : vector<8x64xf32> -> vector<8x64xf32>
    %438 = arith.mulf %434, %437 : vector<8x64xf32>
    %cst_144 = arith.constant dense<0.000000e+00> : vector<8x64xf32>
    %439 = tpu.matmul %438, %4, %cst_144 {dimension_numbers = #tpu.dot_dimension_numbers<[1], [0], [0], [1], [0, 0, 1, 1], [], []>} : vector<8x64xf32>, vector<64x64xf32>, vector<8x64xf32> -> vector<8x64xf32>
    %440 = arith.addf %439, %9 : vector<8x64xf32>
    %cst_145 = arith.constant 2.000000e+01 : f32
    %441 = vector.broadcast %cst_145 : f32 to vector<8x64xf32>
    %442 = arith.minimumf %440, %441 : vector<8x64xf32>
    %443 = math.exp %442 : vector<8x64xf32>
    %cst_146 = arith.constant 2.000000e+00 : f32
    %444 = vector.broadcast %cst_146 : f32 to vector<8x64xf32>
    %445 = arith.addf %443, %444 : vector<8x64xf32>
    %446 = arith.mulf %443, %445 : vector<8x64xf32>
    %447 = arith.mulf %440, %446 : vector<8x64xf32>
    %cst_147 = arith.constant 2.000000e+00 : f32
    %448 = vector.broadcast %cst_147 : f32 to vector<8x64xf32>
    %449 = arith.addf %446, %448 : vector<8x64xf32>
    %450 = tpu.reciprocal %449 {approx = true} : vector<8x64xf32> -> vector<8x64xf32>
    %451 = arith.mulf %447, %450 : vector<8x64xf32>
    %cst_148 = arith.constant dense<0.000000e+00> : vector<8x64xf32>
    %452 = tpu.matmul %451, %5, %cst_148 {dimension_numbers = #tpu.dot_dimension_numbers<[1], [0], [0], [1], [0, 0, 1, 1], [], []>} : vector<8x64xf32>, vector<64x64xf32>, vector<8x64xf32> -> vector<8x64xf32>
    %453 = arith.addf %452, %12 : vector<8x64xf32>
    %cst_149 = arith.constant 2.000000e+01 : f32
    %454 = vector.broadcast %cst_149 : f32 to vector<8x64xf32>
    %455 = arith.minimumf %453, %454 : vector<8x64xf32>
    %456 = math.exp %455 : vector<8x64xf32>
    %cst_150 = arith.constant 2.000000e+00 : f32
    %457 = vector.broadcast %cst_150 : f32 to vector<8x64xf32>
    %458 = arith.addf %456, %457 : vector<8x64xf32>
    %459 = arith.mulf %456, %458 : vector<8x64xf32>
    %460 = arith.mulf %453, %459 : vector<8x64xf32>
    %cst_151 = arith.constant 2.000000e+00 : f32
    %461 = vector.broadcast %cst_151 : f32 to vector<8x64xf32>
    %462 = arith.addf %459, %461 : vector<8x64xf32>
    %463 = tpu.reciprocal %462 {approx = true} : vector<8x64xf32> -> vector<8x64xf32>
    %464 = arith.mulf %460, %463 : vector<8x64xf32>
    %cst_152 = arith.constant dense<0.000000e+00> : vector<8x8xf32>
    %465 = tpu.matmul %464, %6, %cst_152 {dimension_numbers = #tpu.dot_dimension_numbers<[1], [0], [0], [1], [0, 0, 1, 1], [], []>} : vector<8x64xf32>, vector<64x8xf32>, vector<8x8xf32> -> vector<8x8xf32>
    %466 = arith.addf %465, %15 : vector<8x8xf32>
    %c5_i32_153 = arith.constant 5 : i32
    %467 = arith.muli %c5_i32_138, %c5_i32_153 : i32
    %c0_i32_154 = arith.constant 0 : i32
    %468 = arith.addi %467, %c0_i32_154 : i32
    %469 = arith.index_cast %468 : i32 to index
    %470 = memref.load %arg0[%469] : memref<50xf32, #tpu.memory_space<smem>>
    %c1_i32_155 = arith.constant 1 : i32
    %471 = arith.addi %467, %c1_i32_155 : i32
    %472 = arith.index_cast %471 : i32 to index
    %473 = memref.load %arg0[%472] : memref<50xf32, #tpu.memory_space<smem>>
    %c2_i32_156 = arith.constant 2 : i32
    %474 = arith.addi %467, %c2_i32_156 : i32
    %475 = arith.index_cast %474 : i32 to index
    %476 = memref.load %arg0[%475] : memref<50xf32, #tpu.memory_space<smem>>
    %c3_i32_157 = arith.constant 3 : i32
    %477 = arith.addi %467, %c3_i32_157 : i32
    %478 = arith.index_cast %477 : i32 to index
    %479 = memref.load %arg0[%478] : memref<50xf32, #tpu.memory_space<smem>>
    %c4_i32_158 = arith.constant 4 : i32
    %480 = arith.addi %467, %c4_i32_158 : i32
    %481 = arith.index_cast %480 : i32 to index
    %482 = memref.load %arg0[%481] : memref<50xf32, #tpu.memory_space<smem>>
    %483 = vector.broadcast %470 : f32 to vector<8x8xf32>
    %484 = arith.mulf %483, %421 : vector<8x8xf32>
    %485 = vector.broadcast %473 : f32 to vector<8x8xf32>
    %486 = arith.mulf %485, %466 : vector<8x8xf32>
    %487 = arith.subf %484, %486 : vector<8x8xf32>
    %cst_159 = arith.constant -1.000000e+00 : f32
    %cst_160 = arith.constant 1.000000e+00 : f32
    %488 = vector.broadcast %cst_159 : f32 to vector<8x8xf32>
    %489 = arith.maximumf %488, %487 : vector<8x8xf32>
    %490 = vector.broadcast %cst_160 : f32 to vector<8x8xf32>
    %491 = arith.minimumf %490, %489 : vector<8x8xf32>
    %492 = vector.broadcast %476 : f32 to vector<8x8xf32>
    %493 = arith.mulf %492, %491 : vector<8x8xf32>
    %494 = vector.broadcast %479 : f32 to vector<8x8xf32>
    %495 = arith.mulf %494, %421 : vector<8x8xf32>
    %496 = arith.addf %493, %495 : vector<8x8xf32>
    %497 = arith.index_cast %c5_i32_138 : i32 to index
    %c0_161 = arith.constant 0 : index
    %c0_162 = arith.constant 0 : index
    %498 = vector.load %arg3[%497, %c0_161, %c0_162] : memref<10x8x8xf32, #tpu.memory_space<vmem>>, vector<1x8x8xf32>
    %499 = vector.shape_cast %498 : vector<1x8x8xf32> to vector<8x8xf32>
    %500 = vector.broadcast %482 : f32 to vector<8x8xf32>
    %501 = arith.mulf %500, %499 : vector<8x8xf32>
    %502 = arith.addf %496, %501 : vector<8x8xf32>
    %c6_i32 = arith.constant 6 : i32
    %503 = arith.index_cast %c6_i32 : i32 to index
    %c0_163 = arith.constant 0 : index
    %504 = vector.load %arg4[%503, %c0_163] : memref<10x64xf32, #tpu.memory_space<vmem>>, vector<1x64xf32>
    %cst_164 = arith.constant dense<0.000000e+00> : vector<8x64xf32>
    %505 = tpu.matmul %502, %3, %cst_164 {dimension_numbers = #tpu.dot_dimension_numbers<[1], [0], [0], [1], [0, 0, 1, 1], [], []>} : vector<8x8xf32>, vector<8x64xf32>, vector<8x64xf32> -> vector<8x64xf32>
    %506 = arith.addf %505, %2 : vector<8x64xf32>
    %507 = vector.broadcast %504 : vector<1x64xf32> to vector<8x64xf32>
    %508 = arith.addf %506, %507 : vector<8x64xf32>
    %cst_165 = arith.constant 2.000000e+01 : f32
    %509 = vector.broadcast %cst_165 : f32 to vector<8x64xf32>
    %510 = arith.minimumf %508, %509 : vector<8x64xf32>
    %511 = math.exp %510 : vector<8x64xf32>
    %cst_166 = arith.constant 2.000000e+00 : f32
    %512 = vector.broadcast %cst_166 : f32 to vector<8x64xf32>
    %513 = arith.addf %511, %512 : vector<8x64xf32>
    %514 = arith.mulf %511, %513 : vector<8x64xf32>
    %515 = arith.mulf %508, %514 : vector<8x64xf32>
    %cst_167 = arith.constant 2.000000e+00 : f32
    %516 = vector.broadcast %cst_167 : f32 to vector<8x64xf32>
    %517 = arith.addf %514, %516 : vector<8x64xf32>
    %518 = tpu.reciprocal %517 {approx = true} : vector<8x64xf32> -> vector<8x64xf32>
    %519 = arith.mulf %515, %518 : vector<8x64xf32>
    %cst_168 = arith.constant dense<0.000000e+00> : vector<8x64xf32>
    %520 = tpu.matmul %519, %4, %cst_168 {dimension_numbers = #tpu.dot_dimension_numbers<[1], [0], [0], [1], [0, 0, 1, 1], [], []>} : vector<8x64xf32>, vector<64x64xf32>, vector<8x64xf32> -> vector<8x64xf32>
    %521 = arith.addf %520, %9 : vector<8x64xf32>
    %cst_169 = arith.constant 2.000000e+01 : f32
    %522 = vector.broadcast %cst_169 : f32 to vector<8x64xf32>
    %523 = arith.minimumf %521, %522 : vector<8x64xf32>
    %524 = math.exp %523 : vector<8x64xf32>
    %cst_170 = arith.constant 2.000000e+00 : f32
    %525 = vector.broadcast %cst_170 : f32 to vector<8x64xf32>
    %526 = arith.addf %524, %525 : vector<8x64xf32>
    %527 = arith.mulf %524, %526 : vector<8x64xf32>
    %528 = arith.mulf %521, %527 : vector<8x64xf32>
    %cst_171 = arith.constant 2.000000e+00 : f32
    %529 = vector.broadcast %cst_171 : f32 to vector<8x64xf32>
    %530 = arith.addf %527, %529 : vector<8x64xf32>
    %531 = tpu.reciprocal %530 {approx = true} : vector<8x64xf32> -> vector<8x64xf32>
    %532 = arith.mulf %528, %531 : vector<8x64xf32>
    %cst_172 = arith.constant dense<0.000000e+00> : vector<8x64xf32>
    %533 = tpu.matmul %532, %5, %cst_172 {dimension_numbers = #tpu.dot_dimension_numbers<[1], [0], [0], [1], [0, 0, 1, 1], [], []>} : vector<8x64xf32>, vector<64x64xf32>, vector<8x64xf32> -> vector<8x64xf32>
    %534 = arith.addf %533, %12 : vector<8x64xf32>
    %cst_173 = arith.constant 2.000000e+01 : f32
    %535 = vector.broadcast %cst_173 : f32 to vector<8x64xf32>
    %536 = arith.minimumf %534, %535 : vector<8x64xf32>
    %537 = math.exp %536 : vector<8x64xf32>
    %cst_174 = arith.constant 2.000000e+00 : f32
    %538 = vector.broadcast %cst_174 : f32 to vector<8x64xf32>
    %539 = arith.addf %537, %538 : vector<8x64xf32>
    %540 = arith.mulf %537, %539 : vector<8x64xf32>
    %541 = arith.mulf %534, %540 : vector<8x64xf32>
    %cst_175 = arith.constant 2.000000e+00 : f32
    %542 = vector.broadcast %cst_175 : f32 to vector<8x64xf32>
    %543 = arith.addf %540, %542 : vector<8x64xf32>
    %544 = tpu.reciprocal %543 {approx = true} : vector<8x64xf32> -> vector<8x64xf32>
    %545 = arith.mulf %541, %544 : vector<8x64xf32>
    %cst_176 = arith.constant dense<0.000000e+00> : vector<8x8xf32>
    %546 = tpu.matmul %545, %6, %cst_176 {dimension_numbers = #tpu.dot_dimension_numbers<[1], [0], [0], [1], [0, 0, 1, 1], [], []>} : vector<8x64xf32>, vector<64x8xf32>, vector<8x8xf32> -> vector<8x8xf32>
    %547 = arith.addf %546, %15 : vector<8x8xf32>
    %c5_i32_177 = arith.constant 5 : i32
    %548 = arith.muli %c6_i32, %c5_i32_177 : i32
    %c0_i32_178 = arith.constant 0 : i32
    %549 = arith.addi %548, %c0_i32_178 : i32
    %550 = arith.index_cast %549 : i32 to index
    %551 = memref.load %arg0[%550] : memref<50xf32, #tpu.memory_space<smem>>
    %c1_i32_179 = arith.constant 1 : i32
    %552 = arith.addi %548, %c1_i32_179 : i32
    %553 = arith.index_cast %552 : i32 to index
    %554 = memref.load %arg0[%553] : memref<50xf32, #tpu.memory_space<smem>>
    %c2_i32_180 = arith.constant 2 : i32
    %555 = arith.addi %548, %c2_i32_180 : i32
    %556 = arith.index_cast %555 : i32 to index
    %557 = memref.load %arg0[%556] : memref<50xf32, #tpu.memory_space<smem>>
    %c3_i32_181 = arith.constant 3 : i32
    %558 = arith.addi %548, %c3_i32_181 : i32
    %559 = arith.index_cast %558 : i32 to index
    %560 = memref.load %arg0[%559] : memref<50xf32, #tpu.memory_space<smem>>
    %c4_i32_182 = arith.constant 4 : i32
    %561 = arith.addi %548, %c4_i32_182 : i32
    %562 = arith.index_cast %561 : i32 to index
    %563 = memref.load %arg0[%562] : memref<50xf32, #tpu.memory_space<smem>>
    %564 = vector.broadcast %551 : f32 to vector<8x8xf32>
    %565 = arith.mulf %564, %502 : vector<8x8xf32>
    %566 = vector.broadcast %554 : f32 to vector<8x8xf32>
    %567 = arith.mulf %566, %547 : vector<8x8xf32>
    %568 = arith.subf %565, %567 : vector<8x8xf32>
    %cst_183 = arith.constant -1.000000e+00 : f32
    %cst_184 = arith.constant 1.000000e+00 : f32
    %569 = vector.broadcast %cst_183 : f32 to vector<8x8xf32>
    %570 = arith.maximumf %569, %568 : vector<8x8xf32>
    %571 = vector.broadcast %cst_184 : f32 to vector<8x8xf32>
    %572 = arith.minimumf %571, %570 : vector<8x8xf32>
    %573 = vector.broadcast %557 : f32 to vector<8x8xf32>
    %574 = arith.mulf %573, %572 : vector<8x8xf32>
    %575 = vector.broadcast %560 : f32 to vector<8x8xf32>
    %576 = arith.mulf %575, %502 : vector<8x8xf32>
    %577 = arith.addf %574, %576 : vector<8x8xf32>
    %578 = arith.index_cast %c6_i32 : i32 to index
    %c0_185 = arith.constant 0 : index
    %c0_186 = arith.constant 0 : index
    %579 = vector.load %arg3[%578, %c0_185, %c0_186] : memref<10x8x8xf32, #tpu.memory_space<vmem>>, vector<1x8x8xf32>
    %580 = vector.shape_cast %579 : vector<1x8x8xf32> to vector<8x8xf32>
    %581 = vector.broadcast %563 : f32 to vector<8x8xf32>
    %582 = arith.mulf %581, %580 : vector<8x8xf32>
    %583 = arith.addf %577, %582 : vector<8x8xf32>
    %c7_i32 = arith.constant 7 : i32
    %584 = arith.index_cast %c7_i32 : i32 to index
    %c0_187 = arith.constant 0 : index
    %585 = vector.load %arg4[%584, %c0_187] : memref<10x64xf32, #tpu.memory_space<vmem>>, vector<1x64xf32>
    %cst_188 = arith.constant dense<0.000000e+00> : vector<8x64xf32>
    %586 = tpu.matmul %583, %3, %cst_188 {dimension_numbers = #tpu.dot_dimension_numbers<[1], [0], [0], [1], [0, 0, 1, 1], [], []>} : vector<8x8xf32>, vector<8x64xf32>, vector<8x64xf32> -> vector<8x64xf32>
    %587 = arith.addf %586, %2 : vector<8x64xf32>
    %588 = vector.broadcast %585 : vector<1x64xf32> to vector<8x64xf32>
    %589 = arith.addf %587, %588 : vector<8x64xf32>
    %cst_189 = arith.constant 2.000000e+01 : f32
    %590 = vector.broadcast %cst_189 : f32 to vector<8x64xf32>
    %591 = arith.minimumf %589, %590 : vector<8x64xf32>
    %592 = math.exp %591 : vector<8x64xf32>
    %cst_190 = arith.constant 2.000000e+00 : f32
    %593 = vector.broadcast %cst_190 : f32 to vector<8x64xf32>
    %594 = arith.addf %592, %593 : vector<8x64xf32>
    %595 = arith.mulf %592, %594 : vector<8x64xf32>
    %596 = arith.mulf %589, %595 : vector<8x64xf32>
    %cst_191 = arith.constant 2.000000e+00 : f32
    %597 = vector.broadcast %cst_191 : f32 to vector<8x64xf32>
    %598 = arith.addf %595, %597 : vector<8x64xf32>
    %599 = tpu.reciprocal %598 {approx = true} : vector<8x64xf32> -> vector<8x64xf32>
    %600 = arith.mulf %596, %599 : vector<8x64xf32>
    %cst_192 = arith.constant dense<0.000000e+00> : vector<8x64xf32>
    %601 = tpu.matmul %600, %4, %cst_192 {dimension_numbers = #tpu.dot_dimension_numbers<[1], [0], [0], [1], [0, 0, 1, 1], [], []>} : vector<8x64xf32>, vector<64x64xf32>, vector<8x64xf32> -> vector<8x64xf32>
    %602 = arith.addf %601, %9 : vector<8x64xf32>
    %cst_193 = arith.constant 2.000000e+01 : f32
    %603 = vector.broadcast %cst_193 : f32 to vector<8x64xf32>
    %604 = arith.minimumf %602, %603 : vector<8x64xf32>
    %605 = math.exp %604 : vector<8x64xf32>
    %cst_194 = arith.constant 2.000000e+00 : f32
    %606 = vector.broadcast %cst_194 : f32 to vector<8x64xf32>
    %607 = arith.addf %605, %606 : vector<8x64xf32>
    %608 = arith.mulf %605, %607 : vector<8x64xf32>
    %609 = arith.mulf %602, %608 : vector<8x64xf32>
    %cst_195 = arith.constant 2.000000e+00 : f32
    %610 = vector.broadcast %cst_195 : f32 to vector<8x64xf32>
    %611 = arith.addf %608, %610 : vector<8x64xf32>
    %612 = tpu.reciprocal %611 {approx = true} : vector<8x64xf32> -> vector<8x64xf32>
    %613 = arith.mulf %609, %612 : vector<8x64xf32>
    %cst_196 = arith.constant dense<0.000000e+00> : vector<8x64xf32>
    %614 = tpu.matmul %613, %5, %cst_196 {dimension_numbers = #tpu.dot_dimension_numbers<[1], [0], [0], [1], [0, 0, 1, 1], [], []>} : vector<8x64xf32>, vector<64x64xf32>, vector<8x64xf32> -> vector<8x64xf32>
    %615 = arith.addf %614, %12 : vector<8x64xf32>
    %cst_197 = arith.constant 2.000000e+01 : f32
    %616 = vector.broadcast %cst_197 : f32 to vector<8x64xf32>
    %617 = arith.minimumf %615, %616 : vector<8x64xf32>
    %618 = math.exp %617 : vector<8x64xf32>
    %cst_198 = arith.constant 2.000000e+00 : f32
    %619 = vector.broadcast %cst_198 : f32 to vector<8x64xf32>
    %620 = arith.addf %618, %619 : vector<8x64xf32>
    %621 = arith.mulf %618, %620 : vector<8x64xf32>
    %622 = arith.mulf %615, %621 : vector<8x64xf32>
    %cst_199 = arith.constant 2.000000e+00 : f32
    %623 = vector.broadcast %cst_199 : f32 to vector<8x64xf32>
    %624 = arith.addf %621, %623 : vector<8x64xf32>
    %625 = tpu.reciprocal %624 {approx = true} : vector<8x64xf32> -> vector<8x64xf32>
    %626 = arith.mulf %622, %625 : vector<8x64xf32>
    %cst_200 = arith.constant dense<0.000000e+00> : vector<8x8xf32>
    %627 = tpu.matmul %626, %6, %cst_200 {dimension_numbers = #tpu.dot_dimension_numbers<[1], [0], [0], [1], [0, 0, 1, 1], [], []>} : vector<8x64xf32>, vector<64x8xf32>, vector<8x8xf32> -> vector<8x8xf32>
    %628 = arith.addf %627, %15 : vector<8x8xf32>
    %c5_i32_201 = arith.constant 5 : i32
    %629 = arith.muli %c7_i32, %c5_i32_201 : i32
    %c0_i32_202 = arith.constant 0 : i32
    %630 = arith.addi %629, %c0_i32_202 : i32
    %631 = arith.index_cast %630 : i32 to index
    %632 = memref.load %arg0[%631] : memref<50xf32, #tpu.memory_space<smem>>
    %c1_i32_203 = arith.constant 1 : i32
    %633 = arith.addi %629, %c1_i32_203 : i32
    %634 = arith.index_cast %633 : i32 to index
    %635 = memref.load %arg0[%634] : memref<50xf32, #tpu.memory_space<smem>>
    %c2_i32_204 = arith.constant 2 : i32
    %636 = arith.addi %629, %c2_i32_204 : i32
    %637 = arith.index_cast %636 : i32 to index
    %638 = memref.load %arg0[%637] : memref<50xf32, #tpu.memory_space<smem>>
    %c3_i32_205 = arith.constant 3 : i32
    %639 = arith.addi %629, %c3_i32_205 : i32
    %640 = arith.index_cast %639 : i32 to index
    %641 = memref.load %arg0[%640] : memref<50xf32, #tpu.memory_space<smem>>
    %c4_i32_206 = arith.constant 4 : i32
    %642 = arith.addi %629, %c4_i32_206 : i32
    %643 = arith.index_cast %642 : i32 to index
    %644 = memref.load %arg0[%643] : memref<50xf32, #tpu.memory_space<smem>>
    %645 = vector.broadcast %632 : f32 to vector<8x8xf32>
    %646 = arith.mulf %645, %583 : vector<8x8xf32>
    %647 = vector.broadcast %635 : f32 to vector<8x8xf32>
    %648 = arith.mulf %647, %628 : vector<8x8xf32>
    %649 = arith.subf %646, %648 : vector<8x8xf32>
    %cst_207 = arith.constant -1.000000e+00 : f32
    %cst_208 = arith.constant 1.000000e+00 : f32
    %650 = vector.broadcast %cst_207 : f32 to vector<8x8xf32>
    %651 = arith.maximumf %650, %649 : vector<8x8xf32>
    %652 = vector.broadcast %cst_208 : f32 to vector<8x8xf32>
    %653 = arith.minimumf %652, %651 : vector<8x8xf32>
    %654 = vector.broadcast %638 : f32 to vector<8x8xf32>
    %655 = arith.mulf %654, %653 : vector<8x8xf32>
    %656 = vector.broadcast %641 : f32 to vector<8x8xf32>
    %657 = arith.mulf %656, %583 : vector<8x8xf32>
    %658 = arith.addf %655, %657 : vector<8x8xf32>
    %659 = arith.index_cast %c7_i32 : i32 to index
    %c0_209 = arith.constant 0 : index
    %c0_210 = arith.constant 0 : index
    %660 = vector.load %arg3[%659, %c0_209, %c0_210] : memref<10x8x8xf32, #tpu.memory_space<vmem>>, vector<1x8x8xf32>
    %661 = vector.shape_cast %660 : vector<1x8x8xf32> to vector<8x8xf32>
    %662 = vector.broadcast %644 : f32 to vector<8x8xf32>
    %663 = arith.mulf %662, %661 : vector<8x8xf32>
    %664 = arith.addf %658, %663 : vector<8x8xf32>
    %c8_i32 = arith.constant 8 : i32
    %665 = arith.index_cast %c8_i32 : i32 to index
    %c0_211 = arith.constant 0 : index
    %666 = vector.load %arg4[%665, %c0_211] : memref<10x64xf32, #tpu.memory_space<vmem>>, vector<1x64xf32>
    %cst_212 = arith.constant dense<0.000000e+00> : vector<8x64xf32>
    %667 = tpu.matmul %664, %3, %cst_212 {dimension_numbers = #tpu.dot_dimension_numbers<[1], [0], [0], [1], [0, 0, 1, 1], [], []>} : vector<8x8xf32>, vector<8x64xf32>, vector<8x64xf32> -> vector<8x64xf32>
    %668 = arith.addf %667, %2 : vector<8x64xf32>
    %669 = vector.broadcast %666 : vector<1x64xf32> to vector<8x64xf32>
    %670 = arith.addf %668, %669 : vector<8x64xf32>
    %cst_213 = arith.constant 2.000000e+01 : f32
    %671 = vector.broadcast %cst_213 : f32 to vector<8x64xf32>
    %672 = arith.minimumf %670, %671 : vector<8x64xf32>
    %673 = math.exp %672 : vector<8x64xf32>
    %cst_214 = arith.constant 2.000000e+00 : f32
    %674 = vector.broadcast %cst_214 : f32 to vector<8x64xf32>
    %675 = arith.addf %673, %674 : vector<8x64xf32>
    %676 = arith.mulf %673, %675 : vector<8x64xf32>
    %677 = arith.mulf %670, %676 : vector<8x64xf32>
    %cst_215 = arith.constant 2.000000e+00 : f32
    %678 = vector.broadcast %cst_215 : f32 to vector<8x64xf32>
    %679 = arith.addf %676, %678 : vector<8x64xf32>
    %680 = tpu.reciprocal %679 {approx = true} : vector<8x64xf32> -> vector<8x64xf32>
    %681 = arith.mulf %677, %680 : vector<8x64xf32>
    %cst_216 = arith.constant dense<0.000000e+00> : vector<8x64xf32>
    %682 = tpu.matmul %681, %4, %cst_216 {dimension_numbers = #tpu.dot_dimension_numbers<[1], [0], [0], [1], [0, 0, 1, 1], [], []>} : vector<8x64xf32>, vector<64x64xf32>, vector<8x64xf32> -> vector<8x64xf32>
    %683 = arith.addf %682, %9 : vector<8x64xf32>
    %cst_217 = arith.constant 2.000000e+01 : f32
    %684 = vector.broadcast %cst_217 : f32 to vector<8x64xf32>
    %685 = arith.minimumf %683, %684 : vector<8x64xf32>
    %686 = math.exp %685 : vector<8x64xf32>
    %cst_218 = arith.constant 2.000000e+00 : f32
    %687 = vector.broadcast %cst_218 : f32 to vector<8x64xf32>
    %688 = arith.addf %686, %687 : vector<8x64xf32>
    %689 = arith.mulf %686, %688 : vector<8x64xf32>
    %690 = arith.mulf %683, %689 : vector<8x64xf32>
    %cst_219 = arith.constant 2.000000e+00 : f32
    %691 = vector.broadcast %cst_219 : f32 to vector<8x64xf32>
    %692 = arith.addf %689, %691 : vector<8x64xf32>
    %693 = tpu.reciprocal %692 {approx = true} : vector<8x64xf32> -> vector<8x64xf32>
    %694 = arith.mulf %690, %693 : vector<8x64xf32>
    %cst_220 = arith.constant dense<0.000000e+00> : vector<8x64xf32>
    %695 = tpu.matmul %694, %5, %cst_220 {dimension_numbers = #tpu.dot_dimension_numbers<[1], [0], [0], [1], [0, 0, 1, 1], [], []>} : vector<8x64xf32>, vector<64x64xf32>, vector<8x64xf32> -> vector<8x64xf32>
    %696 = arith.addf %695, %12 : vector<8x64xf32>
    %cst_221 = arith.constant 2.000000e+01 : f32
    %697 = vector.broadcast %cst_221 : f32 to vector<8x64xf32>
    %698 = arith.minimumf %696, %697 : vector<8x64xf32>
    %699 = math.exp %698 : vector<8x64xf32>
    %cst_222 = arith.constant 2.000000e+00 : f32
    %700 = vector.broadcast %cst_222 : f32 to vector<8x64xf32>
    %701 = arith.addf %699, %700 : vector<8x64xf32>
    %702 = arith.mulf %699, %701 : vector<8x64xf32>
    %703 = arith.mulf %696, %702 : vector<8x64xf32>
    %cst_223 = arith.constant 2.000000e+00 : f32
    %704 = vector.broadcast %cst_223 : f32 to vector<8x64xf32>
    %705 = arith.addf %702, %704 : vector<8x64xf32>
    %706 = tpu.reciprocal %705 {approx = true} : vector<8x64xf32> -> vector<8x64xf32>
    %707 = arith.mulf %703, %706 : vector<8x64xf32>
    %cst_224 = arith.constant dense<0.000000e+00> : vector<8x8xf32>
    %708 = tpu.matmul %707, %6, %cst_224 {dimension_numbers = #tpu.dot_dimension_numbers<[1], [0], [0], [1], [0, 0, 1, 1], [], []>} : vector<8x64xf32>, vector<64x8xf32>, vector<8x8xf32> -> vector<8x8xf32>
    %709 = arith.addf %708, %15 : vector<8x8xf32>
    %c5_i32_225 = arith.constant 5 : i32
    %710 = arith.muli %c8_i32, %c5_i32_225 : i32
    %c0_i32_226 = arith.constant 0 : i32
    %711 = arith.addi %710, %c0_i32_226 : i32
    %712 = arith.index_cast %711 : i32 to index
    %713 = memref.load %arg0[%712] : memref<50xf32, #tpu.memory_space<smem>>
    %c1_i32_227 = arith.constant 1 : i32
    %714 = arith.addi %710, %c1_i32_227 : i32
    %715 = arith.index_cast %714 : i32 to index
    %716 = memref.load %arg0[%715] : memref<50xf32, #tpu.memory_space<smem>>
    %c2_i32_228 = arith.constant 2 : i32
    %717 = arith.addi %710, %c2_i32_228 : i32
    %718 = arith.index_cast %717 : i32 to index
    %719 = memref.load %arg0[%718] : memref<50xf32, #tpu.memory_space<smem>>
    %c3_i32_229 = arith.constant 3 : i32
    %720 = arith.addi %710, %c3_i32_229 : i32
    %721 = arith.index_cast %720 : i32 to index
    %722 = memref.load %arg0[%721] : memref<50xf32, #tpu.memory_space<smem>>
    %c4_i32_230 = arith.constant 4 : i32
    %723 = arith.addi %710, %c4_i32_230 : i32
    %724 = arith.index_cast %723 : i32 to index
    %725 = memref.load %arg0[%724] : memref<50xf32, #tpu.memory_space<smem>>
    %726 = vector.broadcast %713 : f32 to vector<8x8xf32>
    %727 = arith.mulf %726, %664 : vector<8x8xf32>
    %728 = vector.broadcast %716 : f32 to vector<8x8xf32>
    %729 = arith.mulf %728, %709 : vector<8x8xf32>
    %730 = arith.subf %727, %729 : vector<8x8xf32>
    %cst_231 = arith.constant -1.000000e+00 : f32
    %cst_232 = arith.constant 1.000000e+00 : f32
    %731 = vector.broadcast %cst_231 : f32 to vector<8x8xf32>
    %732 = arith.maximumf %731, %730 : vector<8x8xf32>
    %733 = vector.broadcast %cst_232 : f32 to vector<8x8xf32>
    %734 = arith.minimumf %733, %732 : vector<8x8xf32>
    %735 = vector.broadcast %719 : f32 to vector<8x8xf32>
    %736 = arith.mulf %735, %734 : vector<8x8xf32>
    %737 = vector.broadcast %722 : f32 to vector<8x8xf32>
    %738 = arith.mulf %737, %664 : vector<8x8xf32>
    %739 = arith.addf %736, %738 : vector<8x8xf32>
    %740 = arith.index_cast %c8_i32 : i32 to index
    %c0_233 = arith.constant 0 : index
    %c0_234 = arith.constant 0 : index
    %741 = vector.load %arg3[%740, %c0_233, %c0_234] : memref<10x8x8xf32, #tpu.memory_space<vmem>>, vector<1x8x8xf32>
    %742 = vector.shape_cast %741 : vector<1x8x8xf32> to vector<8x8xf32>
    %743 = vector.broadcast %725 : f32 to vector<8x8xf32>
    %744 = arith.mulf %743, %742 : vector<8x8xf32>
    %745 = arith.addf %739, %744 : vector<8x8xf32>
    %c9_i32 = arith.constant 9 : i32
    %746 = arith.index_cast %c9_i32 : i32 to index
    %c0_235 = arith.constant 0 : index
    %747 = vector.load %arg4[%746, %c0_235] : memref<10x64xf32, #tpu.memory_space<vmem>>, vector<1x64xf32>
    %cst_236 = arith.constant dense<0.000000e+00> : vector<8x64xf32>
    %748 = tpu.matmul %745, %3, %cst_236 {dimension_numbers = #tpu.dot_dimension_numbers<[1], [0], [0], [1], [0, 0, 1, 1], [], []>} : vector<8x8xf32>, vector<8x64xf32>, vector<8x64xf32> -> vector<8x64xf32>
    %749 = arith.addf %748, %2 : vector<8x64xf32>
    %750 = vector.broadcast %747 : vector<1x64xf32> to vector<8x64xf32>
    %751 = arith.addf %749, %750 : vector<8x64xf32>
    %cst_237 = arith.constant 2.000000e+01 : f32
    %752 = vector.broadcast %cst_237 : f32 to vector<8x64xf32>
    %753 = arith.minimumf %751, %752 : vector<8x64xf32>
    %754 = math.exp %753 : vector<8x64xf32>
    %cst_238 = arith.constant 2.000000e+00 : f32
    %755 = vector.broadcast %cst_238 : f32 to vector<8x64xf32>
    %756 = arith.addf %754, %755 : vector<8x64xf32>
    %757 = arith.mulf %754, %756 : vector<8x64xf32>
    %758 = arith.mulf %751, %757 : vector<8x64xf32>
    %cst_239 = arith.constant 2.000000e+00 : f32
    %759 = vector.broadcast %cst_239 : f32 to vector<8x64xf32>
    %760 = arith.addf %757, %759 : vector<8x64xf32>
    %761 = tpu.reciprocal %760 {approx = true} : vector<8x64xf32> -> vector<8x64xf32>
    %762 = arith.mulf %758, %761 : vector<8x64xf32>
    %cst_240 = arith.constant dense<0.000000e+00> : vector<8x64xf32>
    %763 = tpu.matmul %762, %4, %cst_240 {dimension_numbers = #tpu.dot_dimension_numbers<[1], [0], [0], [1], [0, 0, 1, 1], [], []>} : vector<8x64xf32>, vector<64x64xf32>, vector<8x64xf32> -> vector<8x64xf32>
    %764 = arith.addf %763, %9 : vector<8x64xf32>
    %cst_241 = arith.constant 2.000000e+01 : f32
    %765 = vector.broadcast %cst_241 : f32 to vector<8x64xf32>
    %766 = arith.minimumf %764, %765 : vector<8x64xf32>
    %767 = math.exp %766 : vector<8x64xf32>
    %cst_242 = arith.constant 2.000000e+00 : f32
    %768 = vector.broadcast %cst_242 : f32 to vector<8x64xf32>
    %769 = arith.addf %767, %768 : vector<8x64xf32>
    %770 = arith.mulf %767, %769 : vector<8x64xf32>
    %771 = arith.mulf %764, %770 : vector<8x64xf32>
    %cst_243 = arith.constant 2.000000e+00 : f32
    %772 = vector.broadcast %cst_243 : f32 to vector<8x64xf32>
    %773 = arith.addf %770, %772 : vector<8x64xf32>
    %774 = tpu.reciprocal %773 {approx = true} : vector<8x64xf32> -> vector<8x64xf32>
    %775 = arith.mulf %771, %774 : vector<8x64xf32>
    %cst_244 = arith.constant dense<0.000000e+00> : vector<8x64xf32>
    %776 = tpu.matmul %775, %5, %cst_244 {dimension_numbers = #tpu.dot_dimension_numbers<[1], [0], [0], [1], [0, 0, 1, 1], [], []>} : vector<8x64xf32>, vector<64x64xf32>, vector<8x64xf32> -> vector<8x64xf32>
    %777 = arith.addf %776, %12 : vector<8x64xf32>
    %cst_245 = arith.constant 2.000000e+01 : f32
    %778 = vector.broadcast %cst_245 : f32 to vector<8x64xf32>
    %779 = arith.minimumf %777, %778 : vector<8x64xf32>
    %780 = math.exp %779 : vector<8x64xf32>
    %cst_246 = arith.constant 2.000000e+00 : f32
    %781 = vector.broadcast %cst_246 : f32 to vector<8x64xf32>
    %782 = arith.addf %780, %781 : vector<8x64xf32>
    %783 = arith.mulf %780, %782 : vector<8x64xf32>
    %784 = arith.mulf %777, %783 : vector<8x64xf32>
    %cst_247 = arith.constant 2.000000e+00 : f32
    %785 = vector.broadcast %cst_247 : f32 to vector<8x64xf32>
    %786 = arith.addf %783, %785 : vector<8x64xf32>
    %787 = tpu.reciprocal %786 {approx = true} : vector<8x64xf32> -> vector<8x64xf32>
    %788 = arith.mulf %784, %787 : vector<8x64xf32>
    %cst_248 = arith.constant dense<0.000000e+00> : vector<8x8xf32>
    %789 = tpu.matmul %788, %6, %cst_248 {dimension_numbers = #tpu.dot_dimension_numbers<[1], [0], [0], [1], [0, 0, 1, 1], [], []>} : vector<8x64xf32>, vector<64x8xf32>, vector<8x8xf32> -> vector<8x8xf32>
    %790 = arith.addf %789, %15 : vector<8x8xf32>
    %c5_i32_249 = arith.constant 5 : i32
    %791 = arith.muli %c9_i32, %c5_i32_249 : i32
    %c0_i32_250 = arith.constant 0 : i32
    %792 = arith.addi %791, %c0_i32_250 : i32
    %793 = arith.index_cast %792 : i32 to index
    %794 = memref.load %arg0[%793] : memref<50xf32, #tpu.memory_space<smem>>
    %c1_i32_251 = arith.constant 1 : i32
    %795 = arith.addi %791, %c1_i32_251 : i32
    %796 = arith.index_cast %795 : i32 to index
    %797 = memref.load %arg0[%796] : memref<50xf32, #tpu.memory_space<smem>>
    %c2_i32_252 = arith.constant 2 : i32
    %798 = arith.addi %791, %c2_i32_252 : i32
    %799 = arith.index_cast %798 : i32 to index
    %800 = memref.load %arg0[%799] : memref<50xf32, #tpu.memory_space<smem>>
    %c3_i32_253 = arith.constant 3 : i32
    %801 = arith.addi %791, %c3_i32_253 : i32
    %802 = arith.index_cast %801 : i32 to index
    %803 = memref.load %arg0[%802] : memref<50xf32, #tpu.memory_space<smem>>
    %c4_i32_254 = arith.constant 4 : i32
    %804 = arith.addi %791, %c4_i32_254 : i32
    %805 = arith.index_cast %804 : i32 to index
    %806 = memref.load %arg0[%805] : memref<50xf32, #tpu.memory_space<smem>>
    %807 = vector.broadcast %794 : f32 to vector<8x8xf32>
    %808 = arith.mulf %807, %745 : vector<8x8xf32>
    %809 = vector.broadcast %797 : f32 to vector<8x8xf32>
    %810 = arith.mulf %809, %790 : vector<8x8xf32>
    %811 = arith.subf %808, %810 : vector<8x8xf32>
    %cst_255 = arith.constant -1.000000e+00 : f32
    %cst_256 = arith.constant 1.000000e+00 : f32
    %812 = vector.broadcast %cst_255 : f32 to vector<8x8xf32>
    %813 = arith.maximumf %812, %811 : vector<8x8xf32>
    %814 = vector.broadcast %cst_256 : f32 to vector<8x8xf32>
    %815 = arith.minimumf %814, %813 : vector<8x8xf32>
    %816 = vector.broadcast %800 : f32 to vector<8x8xf32>
    %817 = arith.mulf %816, %815 : vector<8x8xf32>
    %818 = vector.broadcast %803 : f32 to vector<8x8xf32>
    %819 = arith.mulf %818, %745 : vector<8x8xf32>
    %820 = arith.addf %817, %819 : vector<8x8xf32>
    %821 = arith.index_cast %c9_i32 : i32 to index
    %c0_257 = arith.constant 0 : index
    %c0_258 = arith.constant 0 : index
    %822 = vector.load %arg3[%821, %c0_257, %c0_258] : memref<10x8x8xf32, #tpu.memory_space<vmem>>, vector<1x8x8xf32>
    %823 = vector.shape_cast %822 : vector<1x8x8xf32> to vector<8x8xf32>
    %824 = vector.broadcast %806 : f32 to vector<8x8xf32>
    %825 = arith.mulf %824, %823 : vector<8x8xf32>
    %826 = arith.addf %820, %825 : vector<8x8xf32>
    %c10_i32 = arith.constant 10 : i32
    %cst_259 = arith.constant -1.000000e+00 : f32
    %cst_260 = arith.constant 1.000000e+00 : f32
    %827 = vector.broadcast %cst_259 : f32 to vector<8x8xf32>
    %828 = arith.maximumf %827, %826 : vector<8x8xf32>
    %829 = vector.broadcast %cst_260 : f32 to vector<8x8xf32>
    %830 = arith.minimumf %829, %828 : vector<8x8xf32>
    %c0_261 = arith.constant 0 : index
    %c0_262 = arith.constant 0 : index
    %831 = vector.load %arg13[%c0_261, %c0_262] : memref<8x8xf32, #tpu.memory_space<vmem>>, vector<8x8xf32>
    tpu.vector_store %arg13[%c0_261, %c0_262], %830 {strides = array<i32>} : memref<8x8xf32, #tpu.memory_space<vmem>>, vector<8x8xf32>,
    return
  }
}

</mosaic_0001>

<llo_original>
// kernel: tpu_custom_call.1
$region0: #{tpu_custom_call.1}
  #allocation0 [shape = 'u32[]', space=smem, size = 0x4, offset = 0x4, fixed_abs, tag = 'smem constant byte address 0x4 - core index']
  #allocation1 [shape = 'u32[72,128]{1,0:T(1,128)}', space=vmem, size = 0x9000, scoped, tag = 'internal scratch']
  %s0 = inlined_call_operand.vmem [shape: f32[50], index: 0, kind: input, shape index: {}]
  %s1 = inlined_call_operand.vmem [shape: f32[8,16], index: 1, kind: input, shape index: {}]
  %s2 = inlined_call_operand.hbm [shape: f32[8,8], index: 2, kind: input, shape index: {}]
  %s3 = inlined_call_operand.vmem [shape: f32[10,8,8], index: 3, kind: input, shape index: {}]
  %s4 = inlined_call_operand.vmem [shape: f32[10,64], index: 4, kind: input, shape index: {}]
  %s5 = inlined_call_operand.hbm [shape: f32[8,64], index: 5, kind: input, shape index: {}]
  %s6 = inlined_call_operand.hbm [shape: f32[16,64], index: 6, kind: input, shape index: {}]
  %s7 = inlined_call_operand.vmem [shape: f32[64,64], index: 7, kind: input, shape index: {}]
  %s8 = inlined_call_operand.vmem [shape: f32[1,64], index: 8, kind: input, shape index: {}]
  %s9 = inlined_call_operand.vmem [shape: f32[64,64], index: 9, kind: input, shape index: {}]
  %s10 = inlined_call_operand.hbm [shape: f32[1,64], index: 10, kind: input, shape index: {}]
  %s11 = inlined_call_operand.vmem [shape: f32[64,8], index: 11, kind: input, shape index: {}]
  %s12 = inlined_call_operand.vmem [shape: f32[1,8], index: 12, kind: input, shape index: {}]
  %s13 = inlined_call_operand.hbm [shape: f32[8,8], index: 13, kind: output, shape index: {}]
  %s14 = sld [smem:[#allocation0]]
  $region82: #{tpu_custom_call.1} parent=0
    _
  %s16 = ssub.s32 1, %s14
  %s17 = scalar_select 0, %s16, %s14
  $region1: #{tpu_custom_call.1} parent=0
    #allocation2 [shape = 'u8[512]{0}', space=smem, size = 0x200, scoped, tag = 'input window, operand 0, single buffered']
    #allocation3 [shape = 's32[1]{0}', space=sflag, size = 0x4, scoped, tag = 'scoped memory for tpu_custom_call.1']
    #allocation4 [shape = 's32[1]{0}', space=sflag, size = 0x4, scoped, tag = 'scoped memory for tpu_custom_call.1']
    #allocation5 [shape = 's32[1]{0}', space=sflag, size = 0x4, scoped, tag = 'scoped memory for tpu_custom_call.1']
    #allocation6 [shape = 'u8[4096]{0}', space=vmem, size = 0x1000, scoped, tag = 'input window, operand 2, single buffered']
    #allocation7 [shape = 'u8[4096]{0}', space=vmem, size = 0x1000, scoped, tag = 'input window, operand 5, single buffered']
    #allocation8 [shape = 's32[1]{0}', space=sflag, size = 0x4, scoped, tag = 'scoped memory for tpu_custom_call.1']
    #allocation9 [shape = 'u8[8192]{0}', space=vmem, size = 0x2000, scoped, tag = 'input window, operand 6, single buffered']
    #allocation10 [shape = 'u8[512]{0}', space=vmem, size = 0x400, scoped, tag = 'input window, operand 10, single buffered']
    #allocation11 [shape = 's32[1]{0}', space=sflag, size = 0x4, scoped, tag = 'scoped memory for tpu_custom_call.1']
    #allocation12 [shape = 'u8[4096]{0}', space=vmem, size = 0x1000, scoped, tag = 'output window, operand 0, single buffered']
    %18 = vsyncpa [#allocation5], 0
    %19 = vsyncpa [#allocation3], 0
    %20 = vsyncpa [#allocation8], 0
    %21 = vsyncpa [#allocation11], 0
    %22 = vsyncpa [#allocation4], 0
    // Predicated region
    $region2: #{tpu_custom_call.1} parent=1 // pred_check
      _
    $region3: #{tpu_custom_call.1} parent=1 // pred_check_branch
      %24 = sbr.rel (0) target = $region5
    $region4: #{tpu_custom_call.1} parent=1 // pred_region
      %26 = vsyncadd [#allocation5], 0
      %s28 = sshll.u32 %s0, 4
      %s29 = int_to_ptr.vmem [resolvable:$true] %s28
      %31 = dma.vmem_to_smem %s29, 16, [#allocation2], [#allocation5]
    $region5: #{tpu_custom_call.1} parent=1 // pred_fallthru
      _
    // Predicated region
    $region6: #{tpu_custom_call.1} parent=1 // pred_check
      _
    $region7: #{tpu_custom_call.1} parent=1 // pred_check_branch
      %33 = sbr.rel (0) target = $region9
    $region8: #{tpu_custom_call.1} parent=1 // pred_region
      _
    $region9: #{tpu_custom_call.1} parent=1 // pred_fallthru
      _
    // Predicated region
    $region10: #{tpu_custom_call.1} parent=1 // pred_check
      _
    $region11: #{tpu_custom_call.1} parent=1 // pred_check_branch
      %35 = sbr.rel (0) target = $region13
    $region12: #{tpu_custom_call.1} parent=1 // pred_region
      %37 = vsyncadd [#allocation3], 0
      %s39 = sshll.u32 %s2, 4
      %s40 = int_to_ptr.hbm [resolvable:$true] %s39
      %s41 = sshll.u32 [#allocation6], 4
      %s42 = int_to_ptr.vmem [resolvable:$true] %s41
      %44 = dma.hbm_to_vmem [thread:$0]  %s40, 128, %s42, [#allocation3]
    $region13: #{tpu_custom_call.1} parent=1 // pred_fallthru
      _
    // Predicated region
    $region14: #{tpu_custom_call.1} parent=1 // pred_check
      _
    $region15: #{tpu_custom_call.1} parent=1 // pred_check_branch
      %46 = sbr.rel (0) target = $region17
    $region16: #{tpu_custom_call.1} parent=1 // pred_region
      _
    $region17: #{tpu_custom_call.1} parent=1 // pred_fallthru
      _
    // Predicated region
    $region18: #{tpu_custom_call.1} parent=1 // pred_check
      _
    $region19: #{tpu_custom_call.1} parent=1 // pred_check_branch
      %48 = sbr.rel (0) target = $region21
    $region20: #{tpu_custom_call.1} parent=1 // pred_region
      _
    $region21: #{tpu_custom_call.1} parent=1 // pred_fallthru
      _
    // Predicated region
    $region22: #{tpu_custom_call.1} parent=1 // pred_check
      _
    $region23: #{tpu_custom_call.1} parent=1 // pred_check_branch
      %50 = sbr.rel (0) target = $region25
    $region24: #{tpu_custom_call.1} parent=1 // pred_region
      %52 = vsyncadd [#allocation8], 0
      %s54 = sshll.u32 %s5, 4
      %s55 = int_to_ptr.hbm [resolvable:$true] %s54
      %s56 = sshll.u32 [#allocation7], 4
      %s57 = int_to_ptr.vmem [resolvable:$true] %s56
      %59 = dma.hbm_to_vmem [thread:$0]  %s55, 128, %s57, [#allocation8]
    $region25: #{tpu_custom_call.1} parent=1 // pred_fallthru
      _
    // Predicated region
    $region26: #{tpu_custom_call.1} parent=1 // pred_check
      _
    $region27: #{tpu_custom_call.1} parent=1 // pred_check_branch
      %61 = sbr.rel (0) target = $region29
    $region28: #{tpu_custom_call.1} parent=1 // pred_region
      %63 = vsyncadd [#allocation8], 0
      %s64 = sshll.u32 %s6, 4
      %s65 = int_to_ptr.hbm [resolvable:$true] %s64
      %s66 = sshll.u32 [#allocation9], 4
      %s67 = int_to_ptr.vmem [resolvable:$true] %s66
      %72 = dma.hbm_to_vmem [thread:$0]  %s65, 256, %s67, [#allocation8], 128, 128, 8
    $region29: #{tpu_custom_call.1} parent=1 // pred_fallthru
      _
    // Predicated region
    $region30: #{tpu_custom_call.1} parent=1 // pred_check
      _
    $region31: #{tpu_custom_call.1} parent=1 // pred_check_branch
      %74 = sbr.rel (0) target = $region33
    $region32: #{tpu_custom_call.1} parent=1 // pred_region
      _
    $region33: #{tpu_custom_call.1} parent=1 // pred_fallthru
      _
    // Predicated region
    $region34: #{tpu_custom_call.1} parent=1 // pred_check
      _
    $region35: #{tpu_custom_call.1} parent=1 // pred_check_branch
      %76 = sbr.rel (0) target = $region37
    $region36: #{tpu_custom_call.1} parent=1 // pred_region
      _
    $region37: #{tpu_custom_call.1} parent=1 // pred_fallthru
      _
    // Predicated region
    $region38: #{tpu_custom_call.1} parent=1 // pred_check
      _
    $region39: #{tpu_custom_call.1} parent=1 // pred_check_branch
      %78 = sbr.rel (0) target = $region41
    $region40: #{tpu_custom_call.1} parent=1 // pred_region
      _
    $region41: #{tpu_custom_call.1} parent=1 // pred_fallthru
      _
    // Predicated region
    $region42: #{tpu_custom_call.1} parent=1 // pred_check
      _
    $region43: #{tpu_custom_call.1} parent=1 // pred_check_branch
      %80 = sbr.rel (0) target = $region45
    $region44: #{tpu_custom_call.1} parent=1 // pred_region
      %82 = vsyncadd [#allocation11], 0
      %s84 = sshll.u32 %s10, 4
      %s85 = int_to_ptr.hbm [resolvable:$true] %s84
      %s86 = sshll.u32 [#allocation10], 4
      %s87 = int_to_ptr.vmem [resolvable:$true] %s86
      %89 = dma.hbm_to_vmem [thread:$0]  %s85, 16, %s87, [#allocation11]
    $region45: #{tpu_custom_call.1} parent=1 // pred_fallthru
      _
    // Predicated region
    $region46: #{tpu_custom_call.1} parent=1 // pred_check
      _
    $region47: #{tpu_custom_call.1} parent=1 // pred_check_branch
      %91 = sbr.rel (0) target = $region49
    $region48: #{tpu_custom_call.1} parent=1 // pred_region
      _
    $region49: #{tpu_custom_call.1} parent=1 // pred_fallthru
      _
    // Predicated region
    $region50: #{tpu_custom_call.1} parent=1 // pred_check
      _
    $region51: #{tpu_custom_call.1} parent=1 // pred_check_branch
      %93 = sbr.rel (0) target = $region53
    $region52: #{tpu_custom_call.1} parent=1 // pred_region
      _
    $region53: #{tpu_custom_call.1} parent=1 // pred_fallthru
      _
    // Predicated region
    $region54: #{tpu_custom_call.1} parent=1 // pred_check
      _
    $region55: #{tpu_custom_call.1} parent=1 // pred_check_branch
      %95 = sbr.rel (0) target = $region57
    $region56: #{tpu_custom_call.1} parent=1 // pred_region
      %97 = dma.done [#allocation5], 16
    $region57: #{tpu_custom_call.1} parent=1 // pred_fallthru
      _
    // Predicated region
    $region58: #{tpu_custom_call.1} parent=1 // pred_check
      _
    $region59: #{tpu_custom_call.1} parent=1 // pred_check_branch
      %99 = sbr.rel (0) target = $region61
    $region60: #{tpu_custom_call.1} parent=1 // pred_region
      %101 = dma.done [#allocation3], 128
    $region61: #{tpu_custom_call.1} parent=1 // pred_fallthru
      _
    // Predicated region
    $region62: #{tpu_custom_call.1} parent=1 // pred_check
      _
    $region63: #{tpu_custom_call.1} parent=1 // pred_check_branch
      %103 = sbr.rel (0) target = $region65
    $region64: #{tpu_custom_call.1} parent=1 // pred_region
      %105 = dma.done [#allocation8], 128
    $region65: #{tpu_custom_call.1} parent=1 // pred_fallthru
      _
    // Predicated region
    $region66: #{tpu_custom_call.1} parent=1 // pred_check
      _
    $region67: #{tpu_custom_call.1} parent=1 // pred_check_branch
      %107 = sbr.rel (0) target = $region69
    $region68: #{tpu_custom_call.1} parent=1 // pred_region
      %109 = dma.done [#allocation8], 256
    $region69: #{tpu_custom_call.1} parent=1 // pred_fallthru
      _
    // Predicated region
    $region70: #{tpu_custom_call.1} parent=1 // pred_check
      _
    $region71: #{tpu_custom_call.1} parent=1 // pred_check_branch
      %111 = sbr.rel (0) target = $region73
    $region72: #{tpu_custom_call.1} parent=1 // pred_region
      %113 = dma.done [#allocation11], 16
    $region73: #{tpu_custom_call.1} parent=1 // pred_fallthru
      _
    %114 = sfence
    %v115 = vld [vmem:[%s1] sm:$0xff]
    %v116 = vld [vmem:[#allocation9] sm:$0xff]
    %v117 = vld [vmem:[#allocation9 + $0x8] sm:$0xff]
    %vm118 = vcmask 130048
    %v120 = vsel %vm118, %v115, 0
    %122 = vmatpush.msra.mxu0 0.0
    %123 = vmatpush.msra.mxu0 0.0
    %124 = vmatpush.msra.mxu0 0.0
    %125 = vmatpush.msra.mxu0 0.0
    %126 = vmatpush.msra.mxu0 0.0
    %127 = vmatpush.msra.mxu0 0.0
    %128 = vmatpush.msra.mxu0 0.0
    %129 = vmatpush.msra.mxu0 0.0
    %130 = vmatpush.msra.mxu0 0.0
    %131 = vmatpush.msra.mxu0 0.0
    %132 = vmatpush.msra.mxu0 0.0
    %133 = vmatpush.msra.mxu0 0.0
    %134 = vmatpush.msra.mxu0 0.0
    %135 = vmatpush.msra.mxu0 0.0
    %136 = vmatpush.msra.mxu0 %v117
    %137 = vmatpush.msra.mxu0 %v116
    %138 = vmatmul.f32.gmra.mxu0 %v120
    %v139 = vpop.f32.mrf.mxu0
    %v140 = vadd.f32 0.0, %v139
    %141 = vdwg.mxu0
    %v142 = vld [vmem:[#allocation7] sm:$0xff]
    %v143 = vld [vmem:[%s7] sm:$0xff]
    %v144 = vld [vmem:[%s7 + $0x8] sm:$0xff]
    %v145 = vld [vmem:[%s7 + $0x10] sm:$0xff]
    %v146 = vld [vmem:[%s7 + $0x18] sm:$0xff]
    %v147 = vld [vmem:[%s7 + $0x20] sm:$0xff]
    %v148 = vld [vmem:[%s7 + $0x28] sm:$0xff]
    %v149 = vld [vmem:[%s7 + $0x30] sm:$0xff]
    %v150 = vld [vmem:[%s7 + $0x38] sm:$0xff]
    %v151 = vld [vmem:[%s9] sm:$0xff]
    %v152 = vld [vmem:[%s9 + $0x8] sm:$0xff]
    %v153 = vld [vmem:[%s9 + $0x10] sm:$0xff]
    %v154 = vld [vmem:[%s9 + $0x18] sm:$0xff]
    %v155 = vld [vmem:[%s9 + $0x20] sm:$0xff]
    %v156 = vld [vmem:[%s9 + $0x28] sm:$0xff]
    %v157 = vld [vmem:[%s9 + $0x30] sm:$0xff]
    %v158 = vld [vmem:[%s9 + $0x38] sm:$0xff]
    %v159 = vld [vmem:[%s11] sm:$0xff]
    %v160 = vld [vmem:[%s11 + $0x8] sm:$0xff]
    %v161 = vld [vmem:[%s11 + $0x10] sm:$0xff]
    %v162 = vld [vmem:[%s11 + $0x18] sm:$0xff]
    %v163 = vld [vmem:[%s11 + $0x20] sm:$0xff]
    %v164 = vld [vmem:[%s11 + $0x28] sm:$0xff]
    %v165 = vld [vmem:[%s11 + $0x30] sm:$0xff]
    %v166 = vld [vmem:[%s11 + $0x38] sm:$0xff]
    %v167 = vld [vmem:[%s8] sm:$0x1]
    %v169 = vperm.slane %v167, 0
    %v171 = vld [vmem:[#allocation10] sm:$0x1]
    %v173 = vperm.slane %v171, 0
    %v175 = vld [vmem:[%s12] sm:$0x1]
    %v177 = vperm.slane %v175, 0
    %v179 = vld [vmem:[#allocation6] sm:$0xff]
    %v180 = vld [vmem:[%s4] sm:$0x1]
    %vm181 = vcmask 64512
    %v183 = vsel %vm181, %v179, 0
    %185 = vmatpush.msra.mxu0 0.0
    %186 = vmatpush.msra.mxu0 0.0
    %187 = vmatpush.msra.mxu0 0.0
    %188 = vmatpush.msra.mxu0 0.0
    %189 = vmatpush.msra.mxu0 0.0
    %190 = vmatpush.msra.mxu0 0.0
    %191 = vmatpush.msra.mxu0 0.0
    %192 = vmatpush.msra.mxu0 0.0
    %193 = vmatpush.msra.mxu0 0.0
    %194 = vmatpush.msra.mxu0 0.0
    %195 = vmatpush.msra.mxu0 0.0
    %196 = vmatpush.msra.mxu0 0.0
    %197 = vmatpush.msra.mxu0 0.0
    %198 = vmatpush.msra.mxu0 0.0
    %199 = vmatpush.msra.mxu0 0.0
    %200 = vmatpush.msra.mxu0 %v142
    %201 = vmatmul.f32.gmra.mxu0 %v183
    %v202 = vpop.f32.mrf.mxu0
    %v203 = vadd.f32 %v140, %v202
    %204 = vdwg.mxu0
    %v205 = vperm.slane %v180, 0
    %v206 = vadd.f32 %v203, %v205
    %v207 = vmin.f32 %v206, 20.0
    %v208 = vmul.f32 %v207, 1.442695
    %v209 = vpow.pop %v208
    %v210 = vadd.f32 %v209, 2.0
    %v211 = vmul.f32 %v209, %v210
    %v212 = vmul.f32 %v206, %v211
    %v213 = vadd.f32 %v211, 2.0
    %v214 = vrcp.pop %v213
    %v215 = vmul.f32 %v212, %v214
    %vm216 = vcmask 523264
    %v218 = vsel %vm216, %v215, 0
    %220 = vmatpush.msra.mxu0 0.0
    %221 = vmatpush.msra.mxu0 0.0
    %222 = vmatpush.msra.mxu0 0.0
    %223 = vmatpush.msra.mxu0 0.0
    %224 = vmatpush.msra.mxu0 0.0
    %225 = vmatpush.msra.mxu0 0.0
    %226 = vmatpush.msra.mxu0 0.0
    %227 = vmatpush.msra.mxu0 0.0
    %228 = vmatpush.msra.mxu0 %v150
    %229 = vmatpush.msra.mxu0 %v149
    %230 = vmatpush.msra.mxu0 %v148
    %231 = vmatpush.msra.mxu0 %v147
    %232 = vmatpush.msra.mxu0 %v146
    %233 = vmatpush.msra.mxu0 %v145
    %234 = vmatpush.msra.mxu0 %v144
    %235 = vmatpush.msra.mxu0 %v143
    %236 = vmatmul.f32.gmra.mxu0 %v218
    %v237 = vpop.f32.mrf.mxu0
    %v238 = vadd.f32 %v169, %v237
    %239 = vdwg.mxu0
    %v240 = vmin.f32 %v238, 20.0
    %v241 = vmul.f32 %v240, 1.442695
    %v242 = vpow.pop %v241
    %v243 = vadd.f32 %v242, 2.0
    %v244 = vmul.f32 %v242, %v243
    %v245 = vmul.f32 %v238, %v244
    %v246 = vadd.f32 %v244, 2.0
    %v247 = vrcp.pop %v246
    %v248 = vmul.f32 %v245, %v247
    %v250 = vsel %vm216, %v248, 0
    %252 = vmatpush.msra.mxu0 0.0
    %253 = vmatpush.msra.mxu0 0.0
    %254 = vmatpush.msra.mxu0 0.0
    %255 = vmatpush.msra.mxu0 0.0
    %256 = vmatpush.msra.mxu0 0.0
    %257 = vmatpush.msra.mxu0 0.0
    %258 = vmatpush.msra.mxu0 0.0
    %259 = vmatpush.msra.mxu0 0.0
    %260 = vmatpush.msra.mxu0 %v158
    %261 = vmatpush.msra.mxu0 %v157
    %262 = vmatpush.msra.mxu0 %v156
    %263 = vmatpush.msra.mxu0 %v155
    %264 = vmatpush.msra.mxu0 %v154
    %265 = vmatpush.msra.mxu0 %v153
    %266 = vmatpush.msra.mxu0 %v152
    %267 = vmatpush.msra.mxu0 %v151
    %268 = vmatmul.f32.gmra.mxu0 %v250
    %v269 = vpop.f32.mrf.mxu0
    %v270 = vadd.f32 %v173, %v269
    %271 = vdwg.mxu0
    %v272 = vmin.f32 %v270, 20.0
    %v273 = vmul.f32 %v272, 1.442695
    %v274 = vpow.pop %v273
    %v275 = vadd.f32 %v274, 2.0
    %v276 = vmul.f32 %v274, %v275
    %v277 = vmul.f32 %v270, %v276
    %v278 = vadd.f32 %v276, 2.0
    %v279 = vrcp.pop %v278
    %v280 = vmul.f32 %v277, %v279
    %v282 = vsel %vm216, %v280, 0
    %284 = vmatpush.msra.mxu0 0.0
    %285 = vmatpush.msra.mxu0 0.0
    %286 = vmatpush.msra.mxu0 0.0
    %287 = vmatpush.msra.mxu0 0.0
    %288 = vmatpush.msra.mxu0 0.0
    %289 = vmatpush.msra.mxu0 0.0
    %290 = vmatpush.msra.mxu0 0.0
    %291 = vmatpush.msra.mxu0 0.0
    %292 = vmatpush.msra.mxu0 %v166
    %293 = vmatpush.msra.mxu0 %v165
    %294 = vmatpush.msra.mxu0 %v164
    %295 = vmatpush.msra.mxu0 %v163
    %296 = vmatpush.msra.mxu0 %v162
    %297 = vmatpush.msra.mxu0 %v161
    %298 = vmatpush.msra.mxu0 %v160
    %299 = vmatpush.msra.mxu0 %v159
    %300 = vmatmul.f32.gmra.mxu0 %v282
    %v301 = vpop.f32.mrf.mxu0
    %v302 = vadd.f32 %v177, %v301
    %303 = vdwg.mxu0
    %s304 = sld [smem:[#allocation2]]
    %s305 = sld [smem:[#allocation2 + $0x1]]
    %s306 = sld [smem:[#allocation2 + $0x2]]
    %s307 = sld [smem:[#allocation2 + $0x3]]
    %s308 = sld [smem:[#allocation2 + $0x4]]
    %v309 = vstv %s304
    %v310 = vmul.f32 %v309, %v179
    %v311 = vstv %s305
    %v312 = vmul.f32 %v311, %v302
    %v313 = vsub.f32 %v310, %v312
    %v314 = vmax.f32 %v313, -1.0
    %v315 = vmin.f32 %v314, 1.0
    %v316 = vstv %s306
    %v317 = vmul.f32 %v316, %v315
    %v318 = vstv %s307
    %v319 = vmul.f32 %v318, %v179
    %v320 = vadd.f32 %v317, %v319
    %v321 = vld [vmem:[%s3] sm:$0xff]
    %v322 = vstv %s308
    %v323 = vmul.f32 %v322, %v321
    %v324 = vadd.f32 %v320, %v323
    %v325 = vld [vmem:[%s4 + $0x1] sm:$0x1]
    %v327 = vsel %vm181, %v324, 0
    %329 = vmatpush.msra.mxu0 0.0
    %330 = vmatpush.msra.mxu0 0.0
    %331 = vmatpush.msra.mxu0 0.0
    %332 = vmatpush.msra.mxu0 0.0
    %333 = vmatpush.msra.mxu0 0.0
    %334 = vmatpush.msra.mxu0 0.0
    %335 = vmatpush.msra.mxu0 0.0
    %336 = vmatpush.msra.mxu0 0.0
    %337 = vmatpush.msra.mxu0 0.0
    %338 = vmatpush.msra.mxu0 0.0
    %339 = vmatpush.msra.mxu0 0.0
    %340 = vmatpush.msra.mxu0 0.0
    %341 = vmatpush.msra.mxu0 0.0
    %342 = vmatpush.msra.mxu0 0.0
    %343 = vmatpush.msra.mxu0 0.0
    %344 = vmatpush.msra.mxu0 %v142
    %345 = vmatmul.f32.gmra.mxu0 %v327
    %v346 = vpop.f32.mrf.mxu0
    %v347 = vadd.f32 %v140, %v346
    %348 = vdwg.mxu0
    %v349 = vperm.slane %v325, 0
    %v350 = vadd.f32 %v347, %v349
    %v351 = vmin.f32 %v350, 20.0
    %v352 = vmul.f32 %v351, 1.442695
    %v353 = vpow.pop %v352
    %v354 = vadd.f32 %v353, 2.0
    %v355 = vmul.f32 %v353, %v354
    %v356 = vmul.f32 %v350, %v355
    %v357 = vadd.f32 %v355, 2.0
    %v358 = vrcp.pop %v357
    %v359 = vmul.f32 %v356, %v358
    %v361 = vsel %vm216, %v359, 0
    %363 = vmatpush.msra.mxu0 0.0
    %364 = vmatpush.msra.mxu0 0.0
    %365 = vmatpush.msra.mxu0 0.0
    %366 = vmatpush.msra.mxu0 0.0
    %367 = vmatpush.msra.mxu0 0.0
    %368 = vmatpush.msra.mxu0 0.0
    %369 = vmatpush.msra.mxu0 0.0
    %370 = vmatpush.msra.mxu0 0.0
    %371 = vmatpush.msra.mxu0 %v150
    %372 = vmatpush.msra.mxu0 %v149
    %373 = vmatpush.msra.mxu0 %v148
    %374 = vmatpush.msra.mxu0 %v147
    %375 = vmatpush.msra.mxu0 %v146
    %376 = vmatpush.msra.mxu0 %v145
    %377 = vmatpush.msra.mxu0 %v144
    %378 = vmatpush.msra.mxu0 %v143
    %379 = vmatmul.f32.gmra.mxu0 %v361
    %v380 = vpop.f32.mrf.mxu0
    %v381 = vadd.f32 %v169, %v380
    %382 = vdwg.mxu0
    %v383 = vmin.f32 %v381, 20.0
    %v384 = vmul.f32 %v383, 1.442695
    %v385 = vpow.pop %v384
    %v386 = vadd.f32 %v385, 2.0
    %v387 = vmul.f32 %v385, %v386
    %v388 = vmul.f32 %v381, %v387
    %v389 = vadd.f32 %v387, 2.0
    %v390 = vrcp.pop %v389
    %v391 = vmul.f32 %v388, %v390
    %v393 = vsel %vm216, %v391, 0
    %395 = vmatpush.msra.mxu0 0.0
    %396 = vmatpush.msra.mxu0 0.0
    %397 = vmatpush.msra.mxu0 0.0
    %398 = vmatpush.msra.mxu0 0.0
    %399 = vmatpush.msra.mxu0 0.0
    %400 = vmatpush.msra.mxu0 0.0
    %401 = vmatpush.msra.mxu0 0.0
    %402 = vmatpush.msra.mxu0 0.0
    %403 = vmatpush.msra.mxu0 %v158
    %404 = vmatpush.msra.mxu0 %v157
    %405 = vmatpush.msra.mxu0 %v156
    %406 = vmatpush.msra.mxu0 %v155
    %407 = vmatpush.msra.mxu0 %v154
    %408 = vmatpush.msra.mxu0 %v153
    %409 = vmatpush.msra.mxu0 %v152
    %410 = vmatpush.msra.mxu0 %v151
    %411 = vmatmul.f32.gmra.mxu0 %v393
    %v412 = vpop.f32.mrf.mxu0
    %v413 = vadd.f32 %v173, %v412
    %414 = vdwg.mxu0
    %v415 = vmin.f32 %v413, 20.0
    %v416 = vmul.f32 %v415, 1.442695
    %v417 = vpow.pop %v416
    %v418 = vadd.f32 %v417, 2.0
    %v419 = vmul.f32 %v417, %v418
    %v420 = vmul.f32 %v413, %v419
    %v421 = vadd.f32 %v419, 2.0
    %v422 = vrcp.pop %v421
    %v423 = vmul.f32 %v420, %v422
    %v425 = vsel %vm216, %v423, 0
    %427 = vmatpush.msra.mxu0 0.0
    %428 = vmatpush.msra.mxu0 0.0
    %429 = vmatpush.msra.mxu0 0.0
    %430 = vmatpush.msra.mxu0 0.0
    %431 = vmatpush.msra.mxu0 0.0
    %432 = vmatpush.msra.mxu0 0.0
    %433 = vmatpush.msra.mxu0 0.0
    %434 = vmatpush.msra.mxu0 0.0
    %435 = vmatpush.msra.mxu0 %v166
    %436 = vmatpush.msra.mxu0 %v165
    %437 = vmatpush.msra.mxu0 %v164
    %438 = vmatpush.msra.mxu0 %v163
    %439 = vmatpush.msra.mxu0 %v162
    %440 = vmatpush.msra.mxu0 %v161
    %441 = vmatpush.msra.mxu0 %v160
    %442 = vmatpush.msra.mxu0 %v159
    %443 = vmatmul.f32.gmra.mxu0 %v425
    %v444 = vpop.f32.mrf.mxu0
    %v445 = vadd.f32 %v177, %v444
    %446 = vdwg.mxu0
    %s447 = sld [smem:[#allocation2 + $0x5]]
    %s448 = sld [smem:[#allocation2 + $0x6]]
    %s449 = sld [smem:[#allocation2 + $0x7]]
    %s450 = sld [smem:[#allocation2 + $0x8]]
    %s451 = sld [smem:[#allocation2 + $0x9]]
    %v452 = vstv %s447
    %v453 = vmul.f32 %v452, %v324
    %v454 = vstv %s448
    %v455 = vmul.f32 %v454, %v445
    %v456 = vsub.f32 %v453, %v455
    %v457 = vmax.f32 %v456, -1.0
    %v458 = vmin.f32 %v457, 1.0
    %v459 = vstv %s449
    %v460 = vmul.f32 %v459, %v458
    %v461 = vstv %s450
    %v462 = vmul.f32 %v461, %v324
    %v463 = vadd.f32 %v460, %v462
    %s464 = scalar_lea.vmem %s3, 8
    %v465 = vld [vmem:[%s464] sm:$0xff]
    %v466 = vstv %s451
    %v467 = vmul.f32 %v466, %v465
    %v468 = vadd.f32 %v463, %v467
    %v469 = vld [vmem:[%s4 + $0x2] sm:$0x1]
    %v471 = vsel %vm181, %v468, 0
    %473 = vmatpush.msra.mxu0 0.0
    %474 = vmatpush.msra.mxu0 0.0
    %475 = vmatpush.msra.mxu0 0.0
    %476 = vmatpush.msra.mxu0 0.0
    %477 = vmatpush.msra.mxu0 0.0
    %478 = vmatpush.msra.mxu0 0.0
    %479 = vmatpush.msra.mxu0 0.0
    %480 = vmatpush.msra.mxu0 0.0
    %481 = vmatpush.msra.mxu0 0.0
    %482 = vmatpush.msra.mxu0 0.0
    %483 = vmatpush.msra.mxu0 0.0
    %484 = vmatpush.msra.mxu0 0.0
    %485 = vmatpush.msra.mxu0 0.0
    %486 = vmatpush.msra.mxu0 0.0
    %487 = vmatpush.msra.mxu0 0.0
    %488 = vmatpush.msra.mxu0 %v142
    %489 = vmatmul.f32.gmra.mxu0 %v471
    %v490 = vpop.f32.mrf.mxu0
    %v491 = vadd.f32 %v140, %v490
    %492 = vdwg.mxu0
    %v493 = vperm.slane %v469, 0
    %v494 = vadd.f32 %v491, %v493
    %v495 = vmin.f32 %v494, 20.0
    %v496 = vmul.f32 %v495, 1.442695
    %v497 = vpow.pop %v496
    %v498 = vadd.f32 %v497, 2.0
    %v499 = vmul.f32 %v497, %v498
    %v500 = vmul.f32 %v494, %v499
    %v501 = vadd.f32 %v499, 2.0
    %v502 = vrcp.pop %v501
    %v503 = vmul.f32 %v500, %v502
    %v505 = vsel %vm216, %v503, 0
    %507 = vmatpush.msra.mxu0 0.0
    %508 = vmatpush.msra.mxu0 0.0
    %509 = vmatpush.msra.mxu0 0.0
    %510 = vmatpush.msra.mxu0 0.0
    %511 = vmatpush.msra.mxu0 0.0
    %512 = vmatpush.msra.mxu0 0.0
    %513 = vmatpush.msra.mxu0 0.0
    %514 = vmatpush.msra.mxu0 0.0
    %515 = vmatpush.msra.mxu0 %v150
    %516 = vmatpush.msra.mxu0 %v149
    %517 = vmatpush.msra.mxu0 %v148
    %518 = vmatpush.msra.mxu0 %v147
    %519 = vmatpush.msra.mxu0 %v146
    %520 = vmatpush.msra.mxu0 %v145
    %521 = vmatpush.msra.mxu0 %v144
    %522 = vmatpush.msra.mxu0 %v143
    %523 = vmatmul.f32.gmra.mxu0 %v505
    %v524 = vpop.f32.mrf.mxu0
    %v525 = vadd.f32 %v169, %v524
    %526 = vdwg.mxu0
    %v527 = vmin.f32 %v525, 20.0
    %v528 = vmul.f32 %v527, 1.442695
    %v529 = vpow.pop %v528
    %v530 = vadd.f32 %v529, 2.0
    %v531 = vmul.f32 %v529, %v530
    %v532 = vmul.f32 %v525, %v531
    %v533 = vadd.f32 %v531, 2.0
    %v534 = vrcp.pop %v533
    %v535 = vmul.f32 %v532, %v534
    %v537 = vsel %vm216, %v535, 0
    %539 = vmatpush.msra.mxu0 0.0
    %540 = vmatpush.msra.mxu0 0.0
    %541 = vmatpush.msra.mxu0 0.0
    %542 = vmatpush.msra.mxu0 0.0
    %543 = vmatpush.msra.mxu0 0.0
    %544 = vmatpush.msra.mxu0 0.0
    %545 = vmatpush.msra.mxu0 0.0
    %546 = vmatpush.msra.mxu0 0.0
    %547 = vmatpush.msra.mxu0 %v158
    %548 = vmatpush.msra.mxu0 %v157
    %549 = vmatpush.msra.mxu0 %v156
    %550 = vmatpush.msra.mxu0 %v155
    %551 = vmatpush.msra.mxu0 %v154
    %552 = vmatpush.msra.mxu0 %v153
    %553 = vmatpush.msra.mxu0 %v152
    %554 = vmatpush.msra.mxu0 %v151
    %555 = vmatmul.f32.gmra.mxu0 %v537
    %v556 = vpop.f32.mrf.mxu0
    %v557 = vadd.f32 %v173, %v556
    %558 = vdwg.mxu0
    %v559 = vmin.f32 %v557, 20.0
    %v560 = vmul.f32 %v559, 1.442695
    %v561 = vpow.pop %v560
    %v562 = vadd.f32 %v561, 2.0
    %v563 = vmul.f32 %v561, %v562
    %v564 = vmul.f32 %v557, %v563
    %v565 = vadd.f32 %v563, 2.0
    %v566 = vrcp.pop %v565
    %v567 = vmul.f32 %v564, %v566
    %v569 = vsel %vm216, %v567, 0
    %571 = vmatpush.msra.mxu0 0.0
    %572 = vmatpush.msra.mxu0 0.0
    %573 = vmatpush.msra.mxu0 0.0
    %574 = vmatpush.msra.mxu0 0.0
    %575 = vmatpush.msra.mxu0 0.0
    %576 = vmatpush.msra.mxu0 0.0
    %577 = vmatpush.msra.mxu0 0.0
    %578 = vmatpush.msra.mxu0 0.0
    %579 = vmatpush.msra.mxu0 %v166
    %580 = vmatpush.msra.mxu0 %v165
    %581 = vmatpush.msra.mxu0 %v164
    %582 = vmatpush.msra.mxu0 %v163
    %583 = vmatpush.msra.mxu0 %v162
    %584 = vmatpush.msra.mxu0 %v161
    %585 = vmatpush.msra.mxu0 %v160
    %586 = vmatpush.msra.mxu0 %v159
    %587 = vmatmul.f32.gmra.mxu0 %v569
    %v588 = vpop.f32.mrf.mxu0
    %v589 = vadd.f32 %v177, %v588
    %590 = vdwg.mxu0
    %s591 = sld [smem:[#allocation2 + $0xa]]
    %s592 = sld [smem:[#allocation2 + $0xb]]
    %s593 = sld [smem:[#allocation2 + $0xc]]
    %s594 = sld [smem:[#allocation2 + $0xd]]
    %s595 = sld [smem:[#allocation2 + $0xe]]
    %v596 = vstv %s591
    %v597 = vmul.f32 %v596, %v468
    %v598 = vstv %s592
    %v599 = vmul.f32 %v598, %v589
    %v600 = vsub.f32 %v597, %v599
    %v601 = vmax.f32 %v600, -1.0
    %v602 = vmin.f32 %v601, 1.0
    %v603 = vstv %s593
    %v604 = vmul.f32 %v603, %v602
    %v605 = vstv %s594
    %v606 = vmul.f32 %v605, %v468
    %v607 = vadd.f32 %v604, %v606
    %s608 = scalar_lea.vmem %s3, 16
    %v609 = vld [vmem:[%s608] sm:$0xff]
    %v610 = vstv %s595
    %v611 = vmul.f32 %v610, %v609
    %v612 = vadd.f32 %v607, %v611
    %v613 = vld [vmem:[%s4 + $0x3] sm:$0x1]
    %v615 = vsel %vm181, %v612, 0
    %617 = vmatpush.msra.mxu0 0.0
    %618 = vmatpush.msra.mxu0 0.0
    %619 = vmatpush.msra.mxu0 0.0
    %620 = vmatpush.msra.mxu0 0.0
    %621 = vmatpush.msra.mxu0 0.0
    %622 = vmatpush.msra.mxu0 0.0
    %623 = vmatpush.msra.mxu0 0.0
    %624 = vmatpush.msra.mxu0 0.0
    %625 = vmatpush.msra.mxu0 0.0
    %626 = vmatpush.msra.mxu0 0.0
    %627 = vmatpush.msra.mxu0 0.0
    %628 = vmatpush.msra.mxu0 0.0
    %629 = vmatpush.msra.mxu0 0.0
    %630 = vmatpush.msra.mxu0 0.0
    %631 = vmatpush.msra.mxu0 0.0
    %632 = vmatpush.msra.mxu0 %v142
    %633 = vmatmul.f32.gmra.mxu0 %v615
    %v634 = vpop.f32.mrf.mxu0
    %v635 = vadd.f32 %v140, %v634
    %636 = vdwg.mxu0
    %v637 = vperm.slane %v613, 0
    %v638 = vadd.f32 %v635, %v637
    %v639 = vmin.f32 %v638, 20.0
    %v640 = vmul.f32 %v639, 1.442695
    %v641 = vpow.pop %v640
    %v642 = vadd.f32 %v641, 2.0
    %v643 = vmul.f32 %v641, %v642
    %v644 = vmul.f32 %v638, %v643
    %v645 = vadd.f32 %v643, 2.0
    %v646 = vrcp.pop %v645
    %v647 = vmul.f32 %v644, %v646
    %v649 = vsel %vm216, %v647, 0
    %651 = vmatpush.msra.mxu0 0.0
    %652 = vmatpush.msra.mxu0 0.0
    %653 = vmatpush.msra.mxu0 0.0
    %654 = vmatpush.msra.mxu0 0.0
    %655 = vmatpush.msra.mxu0 0.0
    %656 = vmatpush.msra.mxu0 0.0
    %657 = vmatpush.msra.mxu0 0.0
    %658 = vmatpush.msra.mxu0 0.0
    %659 = vmatpush.msra.mxu0 %v150
    %660 = vmatpush.msra.mxu0 %v149
    %661 = vmatpush.msra.mxu0 %v148
    %662 = vmatpush.msra.mxu0 %v147
    %663 = vmatpush.msra.mxu0 %v146
    %664 = vmatpush.msra.mxu0 %v145
    %665 = vmatpush.msra.mxu0 %v144
    %666 = vmatpush.msra.mxu0 %v143
    %667 = vmatmul.f32.gmra.mxu0 %v649
    %v668 = vpop.f32.mrf.mxu0
    %v669 = vadd.f32 %v169, %v668
    %670 = vdwg.mxu0
    %v671 = vmin.f32 %v669, 20.0
    %v672 = vmul.f32 %v671, 1.442695
    %v673 = vpow.pop %v672
    %v674 = vadd.f32 %v673, 2.0
    %v675 = vmul.f32 %v673, %v674
    %v676 = vmul.f32 %v669, %v675
    %v677 = vadd.f32 %v675, 2.0
    %v678 = vrcp.pop %v677
    %v679 = vmul.f32 %v676, %v678
    %v681 = vsel %vm216, %v679, 0
    %683 = vmatpush.msra.mxu0 0.0
    %684 = vmatpush.msra.mxu0 0.0
    %685 = vmatpush.msra.mxu0 0.0
    %686 = vmatpush.msra.mxu0 0.0
    %687 = vmatpush.msra.mxu0 0.0
    %688 = vmatpush.msra.mxu0 0.0
    %689 = vmatpush.msra.mxu0 0.0
    %690 = vmatpush.msra.mxu0 0.0
    %691 = vmatpush.msra.mxu0 %v158
    %692 = vmatpush.msra.mxu0 %v157
    %693 = vmatpush.msra.mxu0 %v156
    %694 = vmatpush.msra.mxu0 %v155
    %695 = vmatpush.msra.mxu0 %v154
    %696 = vmatpush.msra.mxu0 %v153
    %697 = vmatpush.msra.mxu0 %v152
    %698 = vmatpush.msra.mxu0 %v151
    %699 = vmatmul.f32.gmra.mxu0 %v681
    %v700 = vpop.f32.mrf.mxu0
    %v701 = vadd.f32 %v173, %v700
    %702 = vdwg.mxu0
    %v703 = vmin.f32 %v701, 20.0
    %v704 = vmul.f32 %v703, 1.442695
    %v705 = vpow.pop %v704
    %v706 = vadd.f32 %v705, 2.0
    %v707 = vmul.f32 %v705, %v706
    %v708 = vmul.f32 %v701, %v707
    %v709 = vadd.f32 %v707, 2.0
    %v710 = vrcp.pop %v709
    %v711 = vmul.f32 %v708, %v710
    %v713 = vsel %vm216, %v711, 0
    %715 = vmatpush.msra.mxu0 0.0
    %716 = vmatpush.msra.mxu0 0.0
    %717 = vmatpush.msra.mxu0 0.0
    %718 = vmatpush.msra.mxu0 0.0
    %719 = vmatpush.msra.mxu0 0.0
    %720 = vmatpush.msra.mxu0 0.0
    %721 = vmatpush.msra.mxu0 0.0
    %722 = vmatpush.msra.mxu0 0.0
    %723 = vmatpush.msra.mxu0 %v166
    %724 = vmatpush.msra.mxu0 %v165
    %725 = vmatpush.msra.mxu0 %v164
    %726 = vmatpush.msra.mxu0 %v163
    %727 = vmatpush.msra.mxu0 %v162
    %728 = vmatpush.msra.mxu0 %v161
    %729 = vmatpush.msra.mxu0 %v160
    %730 = vmatpush.msra.mxu0 %v159
    %731 = vmatmul.f32.gmra.mxu0 %v713
    %v732 = vpop.f32.mrf.mxu0
    %v733 = vadd.f32 %v177, %v732
    %734 = vdwg.mxu0
    %s735 = sld [smem:[#allocation2 + $0xf]]
    %s736 = sld [smem:[#allocation2 + $0x10]]
    %s737 = sld [smem:[#allocation2 + $0x11]]
    %s738 = sld [smem:[#allocation2 + $0x12]]
    %s739 = sld [smem:[#allocation2 + $0x13]]
    %v740 = vstv %s735
    %v741 = vmul.f32 %v740, %v612
    %v742 = vstv %s736
    %v743 = vmul.f32 %v742, %v733
    %v744 = vsub.f32 %v741, %v743
    %v745 = vmax.f32 %v744, -1.0
    %v746 = vmin.f32 %v745, 1.0
    %v747 = vstv %s737
    %v748 = vmul.f32 %v747, %v746
    %v749 = vstv %s738
    %v750 = vmul.f32 %v749, %v612
    %v751 = vadd.f32 %v748, %v750
    %s752 = scalar_lea.vmem %s3, 24
    %v753 = vld [vmem:[%s752] sm:$0xff]
    %v754 = vstv %s739
    %v755 = vmul.f32 %v754, %v753
    %v756 = vadd.f32 %v751, %v755
    %v757 = vld [vmem:[%s4 + $0x4] sm:$0x1]
    %v759 = vsel %vm181, %v756, 0
    %761 = vmatpush.msra.mxu0 0.0
    %762 = vmatpush.msra.mxu0 0.0
    %763 = vmatpush.msra.mxu0 0.0
    %764 = vmatpush.msra.mxu0 0.0
    %765 = vmatpush.msra.mxu0 0.0
    %766 = vmatpush.msra.mxu0 0.0
    %767 = vmatpush.msra.mxu0 0.0
    %768 = vmatpush.msra.mxu0 0.0
    %769 = vmatpush.msra.mxu0 0.0
    %770 = vmatpush.msra.mxu0 0.0
    %771 = vmatpush.msra.mxu0 0.0
    %772 = vmatpush.msra.mxu0 0.0
    %773 = vmatpush.msra.mxu0 0.0
    %774 = vmatpush.msra.mxu0 0.0
    %775 = vmatpush.msra.mxu0 0.0
    %776 = vmatpush.msra.mxu0 %v142
    %777 = vmatmul.f32.gmra.mxu0 %v759
    %v778 = vpop.f32.mrf.mxu0
    %v779 = vadd.f32 %v140, %v778
    %780 = vdwg.mxu0
    %v781 = vperm.slane %v757, 0
    %v782 = vadd.f32 %v779, %v781
    %v783 = vmin.f32 %v782, 20.0
    %v784 = vmul.f32 %v783, 1.442695
    %v785 = vpow.pop %v784
    %v786 = vadd.f32 %v785, 2.0
    %v787 = vmul.f32 %v785, %v786
    %v788 = vmul.f32 %v782, %v787
    %v789 = vadd.f32 %v787, 2.0
    %v790 = vrcp.pop %v789
    %v791 = vmul.f32 %v788, %v790
    %v793 = vsel %vm216, %v791, 0
    %795 = vmatpush.msra.mxu0 0.0
    %796 = vmatpush.msra.mxu0 0.0
    %797 = vmatpush.msra.mxu0 0.0
    %798 = vmatpush.msra.mxu0 0.0
    %799 = vmatpush.msra.mxu0 0.0
    %800 = vmatpush.msra.mxu0 0.0
    %801 = vmatpush.msra.mxu0 0.0
    %802 = vmatpush.msra.mxu0 0.0
    %803 = vmatpush.msra.mxu0 %v150
    %804 = vmatpush.msra.mxu0 %v149
    %805 = vmatpush.msra.mxu0 %v148
    %806 = vmatpush.msra.mxu0 %v147
    %807 = vmatpush.msra.mxu0 %v146
    %808 = vmatpush.msra.mxu0 %v145
    %809 = vmatpush.msra.mxu0 %v144
    %810 = vmatpush.msra.mxu0 %v143
    %811 = vmatmul.f32.gmra.mxu0 %v793
    %v812 = vpop.f32.mrf.mxu0
    %v813 = vadd.f32 %v169, %v812
    %814 = vdwg.mxu0
    %v815 = vmin.f32 %v813, 20.0
    %v816 = vmul.f32 %v815, 1.442695
    %v817 = vpow.pop %v816
    %v818 = vadd.f32 %v817, 2.0
    %v819 = vmul.f32 %v817, %v818
    %v820 = vmul.f32 %v813, %v819
    %v821 = vadd.f32 %v819, 2.0
    %v822 = vrcp.pop %v821
    %v823 = vmul.f32 %v820, %v822
    %v825 = vsel %vm216, %v823, 0
    %827 = vmatpush.msra.mxu0 0.0
    %828 = vmatpush.msra.mxu0 0.0
    %829 = vmatpush.msra.mxu0 0.0
    %830 = vmatpush.msra.mxu0 0.0
    %831 = vmatpush.msra.mxu0 0.0
    %832 = vmatpush.msra.mxu0 0.0
    %833 = vmatpush.msra.mxu0 0.0
    %834 = vmatpush.msra.mxu0 0.0
    %835 = vmatpush.msra.mxu0 %v158
    %836 = vmatpush.msra.mxu0 %v157
    %837 = vmatpush.msra.mxu0 %v156
    %838 = vmatpush.msra.mxu0 %v155
    %839 = vmatpush.msra.mxu0 %v154
    %840 = vmatpush.msra.mxu0 %v153
    %841 = vmatpush.msra.mxu0 %v152
    %842 = vmatpush.msra.mxu0 %v151
    %843 = vmatmul.f32.gmra.mxu0 %v825
    %v844 = vpop.f32.mrf.mxu0
    %v845 = vadd.f32 %v173, %v844
    %846 = vdwg.mxu0
    %v847 = vmin.f32 %v845, 20.0
    %v848 = vmul.f32 %v847, 1.442695
    %v849 = vpow.pop %v848
    %v850 = vadd.f32 %v849, 2.0
    %v851 = vmul.f32 %v849, %v850
    %v852 = vmul.f32 %v845, %v851
    %v853 = vadd.f32 %v851, 2.0
    %v854 = vrcp.pop %v853
    %v855 = vmul.f32 %v852, %v854
    %v857 = vsel %vm216, %v855, 0
    %859 = vmatpush.msra.mxu0 0.0
    %860 = vmatpush.msra.mxu0 0.0
    %861 = vmatpush.msra.mxu0 0.0
    %862 = vmatpush.msra.mxu0 0.0
    %863 = vmatpush.msra.mxu0 0.0
    %864 = vmatpush.msra.mxu0 0.0
    %865 = vmatpush.msra.mxu0 0.0
    %866 = vmatpush.msra.mxu0 0.0
    %867 = vmatpush.msra.mxu0 %v166
    %868 = vmatpush.msra.mxu0 %v165
    %869 = vmatpush.msra.mxu0 %v164
    %870 = vmatpush.msra.mxu0 %v163
    %871 = vmatpush.msra.mxu0 %v162
    %872 = vmatpush.msra.mxu0 %v161
    %873 = vmatpush.msra.mxu0 %v160
    %874 = vmatpush.msra.mxu0 %v159
    %875 = vmatmul.f32.gmra.mxu0 %v857
    %v876 = vpop.f32.mrf.mxu0
    %v877 = vadd.f32 %v177, %v876
    %878 = vdwg.mxu0
    %s879 = sld [smem:[#allocation2 + $0x14]]
    %s880 = sld [smem:[#allocation2 + $0x15]]
    %s881 = sld [smem:[#allocation2 + $0x16]]
    %s882 = sld [smem:[#allocation2 + $0x17]]
    %s883 = sld [smem:[#allocation2 + $0x18]]
    %v884 = vstv %s879
    %v885 = vmul.f32 %v884, %v756
    %v886 = vstv %s880
    %v887 = vmul.f32 %v886, %v877
    %v888 = vsub.f32 %v885, %v887
    %v889 = vmax.f32 %v888, -1.0
    %v890 = vmin.f32 %v889, 1.0
    %v891 = vstv %s881
    %v892 = vmul.f32 %v891, %v890
    %v893 = vstv %s882
    %v894 = vmul.f32 %v893, %v756
    %v895 = vadd.f32 %v892, %v894
    %s896 = scalar_lea.vmem %s3, 32
    %v897 = vld [vmem:[%s896] sm:$0xff]
    %v898 = vstv %s883
    %v899 = vmul.f32 %v898, %v897
    %v900 = vadd.f32 %v895, %v899
    %v901 = vld [vmem:[%s4 + $0x5] sm:$0x1]
    %v903 = vsel %vm181, %v900, 0
    %905 = vmatpush.msra.mxu0 0.0
    %906 = vmatpush.msra.mxu0 0.0
    %907 = vmatpush.msra.mxu0 0.0
    %908 = vmatpush.msra.mxu0 0.0
    %909 = vmatpush.msra.mxu0 0.0
    %910 = vmatpush.msra.mxu0 0.0
    %911 = vmatpush.msra.mxu0 0.0
    %912 = vmatpush.msra.mxu0 0.0
    %913 = vmatpush.msra.mxu0 0.0
    %914 = vmatpush.msra.mxu0 0.0
    %915 = vmatpush.msra.mxu0 0.0
    %916 = vmatpush.msra.mxu0 0.0
    %917 = vmatpush.msra.mxu0 0.0
    %918 = vmatpush.msra.mxu0 0.0
    %919 = vmatpush.msra.mxu0 0.0
    %920 = vmatpush.msra.mxu0 %v142
    %921 = vmatmul.f32.gmra.mxu0 %v903
    %v922 = vpop.f32.mrf.mxu0
    %v923 = vadd.f32 %v140, %v922
    %924 = vdwg.mxu0
    %v925 = vperm.slane %v901, 0
    %v926 = vadd.f32 %v923, %v925
    %v927 = vmin.f32 %v926, 20.0
    %v928 = vmul.f32 %v927, 1.442695
    %v929 = vpow.pop %v928
    %v930 = vadd.f32 %v929, 2.0
    %v931 = vmul.f32 %v929, %v930
    %v932 = vmul.f32 %v926, %v931
    %v933 = vadd.f32 %v931, 2.0
    %v934 = vrcp.pop %v933
    %v935 = vmul.f32 %v932, %v934
    %v937 = vsel %vm216, %v935, 0
    %939 = vmatpush.msra.mxu0 0.0
    %940 = vmatpush.msra.mxu0 0.0
    %941 = vmatpush.msra.mxu0 0.0
    %942 = vmatpush.msra.mxu0 0.0
    %943 = vmatpush.msra.mxu0 0.0
    %944 = vmatpush.msra.mxu0 0.0
    %945 = vmatpush.msra.mxu0 0.0
    %946 = vmatpush.msra.mxu0 0.0
    %947 = vmatpush.msra.mxu0 %v150
    %948 = vmatpush.msra.mxu0 %v149
    %949 = vmatpush.msra.mxu0 %v148
    %950 = vmatpush.msra.mxu0 %v147
    %951 = vmatpush.msra.mxu0 %v146
    %952 = vmatpush.msra.mxu0 %v145
    %953 = vmatpush.msra.mxu0 %v144
    %954 = vmatpush.msra.mxu0 %v143
    %955 = vmatmul.f32.gmra.mxu0 %v937
    %v956 = vpop.f32.mrf.mxu0
    %v957 = vadd.f32 %v169, %v956
    %958 = vdwg.mxu0
    %v959 = vmin.f32 %v957, 20.0
    %v960 = vmul.f32 %v959, 1.442695
    %v961 = vpow.pop %v960
    %v962 = vadd.f32 %v961, 2.0
    %v963 = vmul.f32 %v961, %v962
    %v964 = vmul.f32 %v957, %v963
    %v965 = vadd.f32 %v963, 2.0
    %v966 = vrcp.pop %v965
    %v967 = vmul.f32 %v964, %v966
    %v969 = vsel %vm216, %v967, 0
    %971 = vmatpush.msra.mxu0 0.0
    %972 = vmatpush.msra.mxu0 0.0
    %973 = vmatpush.msra.mxu0 0.0
    %974 = vmatpush.msra.mxu0 0.0
    %975 = vmatpush.msra.mxu0 0.0
    %976 = vmatpush.msra.mxu0 0.0
    %977 = vmatpush.msra.mxu0 0.0
    %978 = vmatpush.msra.mxu0 0.0
    %979 = vmatpush.msra.mxu0 %v158
    %980 = vmatpush.msra.mxu0 %v157
    %981 = vmatpush.msra.mxu0 %v156
    %982 = vmatpush.msra.mxu0 %v155
    %983 = vmatpush.msra.mxu0 %v154
    %984 = vmatpush.msra.mxu0 %v153
    %985 = vmatpush.msra.mxu0 %v152
    %986 = vmatpush.msra.mxu0 %v151
    %987 = vmatmul.f32.gmra.mxu0 %v969
    %v988 = vpop.f32.mrf.mxu0
    %v989 = vadd.f32 %v173, %v988
    %990 = vdwg.mxu0
    %v991 = vmin.f32 %v989, 20.0
    %v992 = vmul.f32 %v991, 1.442695
    %v993 = vpow.pop %v992
    %v994 = vadd.f32 %v993, 2.0
    %v995 = vmul.f32 %v993, %v994
    %v996 = vmul.f32 %v989, %v995
    %v997 = vadd.f32 %v995, 2.0
    %v998 = vrcp.pop %v997
    %v999 = vmul.f32 %v996, %v998
    %v1001 = vsel %vm216, %v999, 0
    %1003 = vmatpush.msra.mxu0 0.0
    %1004 = vmatpush.msra.mxu0 0.0
    %1005 = vmatpush.msra.mxu0 0.0
    %1006 = vmatpush.msra.mxu0 0.0
    %1007 = vmatpush.msra.mxu0 0.0
    %1008 = vmatpush.msra.mxu0 0.0
    %1009 = vmatpush.msra.mxu0 0.0
    %1010 = vmatpush.msra.mxu0 0.0
    %1011 = vmatpush.msra.mxu0 %v166
    %1012 = vmatpush.msra.mxu0 %v165
    %1013 = vmatpush.msra.mxu0 %v164
    %1014 = vmatpush.msra.mxu0 %v163
    %1015 = vmatpush.msra.mxu0 %v162
    %1016 = vmatpush.msra.mxu0 %v161
    %1017 = vmatpush.msra.mxu0 %v160
    %1018 = vmatpush.msra.mxu0 %v159
    %1019 = vmatmul.f32.gmra.mxu0 %v1001
    %v1020 = vpop.f32.mrf.mxu0
    %v1021 = vadd.f32 %v177, %v1020
    %1022 = vdwg.mxu0
    %s1023 = sld [smem:[#allocation2 + $0x19]]
    %s1024 = sld [smem:[#allocation2 + $0x1a]]
    %s1025 = sld [smem:[#allocation2 + $0x1b]]
    %s1026 = sld [smem:[#allocation2 + $0x1c]]
    %s1027 = sld [smem:[#allocation2 + $0x1d]]
    %v1028 = vstv %s1023
    %v1029 = vmul.f32 %v1028, %v900
    %v1030 = vstv %s1024
    %v1031 = vmul.f32 %v1030, %v1021
    %v1032 = vsub.f32 %v1029, %v1031
    %v1033 = vmax.f32 %v1032, -1.0
    %v1034 = vmin.f32 %v1033, 1.0
    %v1035 = vstv %s1025
    %v1036 = vmul.f32 %v1035, %v1034
    %v1037 = vstv %s1026
    %v1038 = vmul.f32 %v1037, %v900
    %v1039 = vadd.f32 %v1036, %v1038
    %s1040 = scalar_lea.vmem %s3, 40
    %v1041 = vld [vmem:[%s1040] sm:$0xff]
    %v1042 = vstv %s1027
    %v1043 = vmul.f32 %v1042, %v1041
    %v1044 = vadd.f32 %v1039, %v1043
    %v1045 = vld [vmem:[%s4 + $0x6] sm:$0x1]
    %v1047 = vsel %vm181, %v1044, 0
    %1049 = vmatpush.msra.mxu0 0.0
    %1050 = vmatpush.msra.mxu0 0.0
    %1051 = vmatpush.msra.mxu0 0.0
    %1052 = vmatpush.msra.mxu0 0.0
    %1053 = vmatpush.msra.mxu0 0.0
    %1054 = vmatpush.msra.mxu0 0.0
    %1055 = vmatpush.msra.mxu0 0.0
    %1056 = vmatpush.msra.mxu0 0.0
    %1057 = vmatpush.msra.mxu0 0.0
    %1058 = vmatpush.msra.mxu0 0.0
    %1059 = vmatpush.msra.mxu0 0.0
    %1060 = vmatpush.msra.mxu0 0.0
    %1061 = vmatpush.msra.mxu0 0.0
    %1062 = vmatpush.msra.mxu0 0.0
    %1063 = vmatpush.msra.mxu0 0.0
    %1064 = vmatpush.msra.mxu0 %v142
    %1065 = vmatmul.f32.gmra.mxu0 %v1047
    %v1066 = vpop.f32.mrf.mxu0
    %v1067 = vadd.f32 %v140, %v1066
    %1068 = vdwg.mxu0
    %v1069 = vperm.slane %v1045, 0
    %v1070 = vadd.f32 %v1067, %v1069
    %v1071 = vmin.f32 %v1070, 20.0
    %v1072 = vmul.f32 %v1071, 1.442695
    %v1073 = vpow.pop %v1072
    %v1074 = vadd.f32 %v1073, 2.0
    %v1075 = vmul.f32 %v1073, %v1074
    %v1076 = vmul.f32 %v1070, %v1075
    %v1077 = vadd.f32 %v1075, 2.0
    %v1078 = vrcp.pop %v1077
    %v1079 = vmul.f32 %v1076, %v1078
    %v1081 = vsel %vm216, %v1079, 0
    %1083 = vmatpush.msra.mxu0 0.0
    %1084 = vmatpush.msra.mxu0 0.0
    %1085 = vmatpush.msra.mxu0 0.0
    %1086 = vmatpush.msra.mxu0 0.0
    %1087 = vmatpush.msra.mxu0 0.0
    %1088 = vmatpush.msra.mxu0 0.0
    %1089 = vmatpush.msra.mxu0 0.0
    %1090 = vmatpush.msra.mxu0 0.0
    %1091 = vmatpush.msra.mxu0 %v150
    %1092 = vmatpush.msra.mxu0 %v149
    %1093 = vmatpush.msra.mxu0 %v148
    %1094 = vmatpush.msra.mxu0 %v147
    %1095 = vmatpush.msra.mxu0 %v146
    %1096 = vmatpush.msra.mxu0 %v145
    %1097 = vmatpush.msra.mxu0 %v144
    %1098 = vmatpush.msra.mxu0 %v143
    %1099 = vmatmul.f32.gmra.mxu0 %v1081
    %v1100 = vpop.f32.mrf.mxu0
    %v1101 = vadd.f32 %v169, %v1100
    %1102 = vdwg.mxu0
    %v1103 = vmin.f32 %v1101, 20.0
    %v1104 = vmul.f32 %v1103, 1.442695
    %v1105 = vpow.pop %v1104
    %v1106 = vadd.f32 %v1105, 2.0
    %v1107 = vmul.f32 %v1105, %v1106
    %v1108 = vmul.f32 %v1101, %v1107
    %v1109 = vadd.f32 %v1107, 2.0
    %v1110 = vrcp.pop %v1109
    %v1111 = vmul.f32 %v1108, %v1110
    %v1113 = vsel %vm216, %v1111, 0
    %1115 = vmatpush.msra.mxu0 0.0
    %1116 = vmatpush.msra.mxu0 0.0
    %1117 = vmatpush.msra.mxu0 0.0
    %1118 = vmatpush.msra.mxu0 0.0
    %1119 = vmatpush.msra.mxu0 0.0
    %1120 = vmatpush.msra.mxu0 0.0
    %1121 = vmatpush.msra.mxu0 0.0
    %1122 = vmatpush.msra.mxu0 0.0
    %1123 = vmatpush.msra.mxu0 %v158
    %1124 = vmatpush.msra.mxu0 %v157
    %1125 = vmatpush.msra.mxu0 %v156
    %1126 = vmatpush.msra.mxu0 %v155
    %1127 = vmatpush.msra.mxu0 %v154
    %1128 = vmatpush.msra.mxu0 %v153
    %1129 = vmatpush.msra.mxu0 %v152
    %1130 = vmatpush.msra.mxu0 %v151
    %1131 = vmatmul.f32.gmra.mxu0 %v1113
    %v1132 = vpop.f32.mrf.mxu0
    %v1133 = vadd.f32 %v173, %v1132
    %1134 = vdwg.mxu0
    %v1135 = vmin.f32 %v1133, 20.0
    %v1136 = vmul.f32 %v1135, 1.442695
    %v1137 = vpow.pop %v1136
    %v1138 = vadd.f32 %v1137, 2.0
    %v1139 = vmul.f32 %v1137, %v1138
    %v1140 = vmul.f32 %v1133, %v1139
    %v1141 = vadd.f32 %v1139, 2.0
    %v1142 = vrcp.pop %v1141
    %v1143 = vmul.f32 %v1140, %v1142
    %v1145 = vsel %vm216, %v1143, 0
    %1147 = vmatpush.msra.mxu0 0.0
    %1148 = vmatpush.msra.mxu0 0.0
    %1149 = vmatpush.msra.mxu0 0.0
    %1150 = vmatpush.msra.mxu0 0.0
    %1151 = vmatpush.msra.mxu0 0.0
    %1152 = vmatpush.msra.mxu0 0.0
    %1153 = vmatpush.msra.mxu0 0.0
    %1154 = vmatpush.msra.mxu0 0.0
    %1155 = vmatpush.msra.mxu0 %v166
    %1156 = vmatpush.msra.mxu0 %v165
    %1157 = vmatpush.msra.mxu0 %v164
    %1158 = vmatpush.msra.mxu0 %v163
    %1159 = vmatpush.msra.mxu0 %v162
    %1160 = vmatpush.msra.mxu0 %v161
    %1161 = vmatpush.msra.mxu0 %v160
    %1162 = vmatpush.msra.mxu0 %v159
    %1163 = vmatmul.f32.gmra.mxu0 %v1145
    %v1164 = vpop.f32.mrf.mxu0
    %v1165 = vadd.f32 %v177, %v1164
    %1166 = vdwg.mxu0
    %s1167 = sld [smem:[#allocation2 + $0x1e]]
    %s1168 = sld [smem:[#allocation2 + $0x1f]]
    %s1169 = sld [smem:[#allocation2 + $0x20]]
    %s1170 = sld [smem:[#allocation2 + $0x21]]
    %s1171 = sld [smem:[#allocation2 + $0x22]]
    %v1172 = vstv %s1167
    %v1173 = vmul.f32 %v1172, %v1044
    %v1174 = vstv %s1168
    %v1175 = vmul.f32 %v1174, %v1165
    %v1176 = vsub.f32 %v1173, %v1175
    %v1177 = vmax.f32 %v1176, -1.0
    %v1178 = vmin.f32 %v1177, 1.0
    %v1179 = vstv %s1169
    %v1180 = vmul.f32 %v1179, %v1178
    %v1181 = vstv %s1170
    %v1182 = vmul.f32 %v1181, %v1044
    %v1183 = vadd.f32 %v1180, %v1182
    %s1184 = scalar_lea.vmem %s3, 48
    %v1185 = vld [vmem:[%s1184] sm:$0xff]
    %v1186 = vstv %s1171
    %v1187 = vmul.f32 %v1186, %v1185
    %v1188 = vadd.f32 %v1183, %v1187
    %v1189 = vld [vmem:[%s4 + $0x7] sm:$0x1]
    %v1191 = vsel %vm181, %v1188, 0
    %1193 = vmatpush.msra.mxu0 0.0
    %1194 = vmatpush.msra.mxu0 0.0
    %1195 = vmatpush.msra.mxu0 0.0
    %1196 = vmatpush.msra.mxu0 0.0
    %1197 = vmatpush.msra.mxu0 0.0
    %1198 = vmatpush.msra.mxu0 0.0
    %1199 = vmatpush.msra.mxu0 0.0
    %1200 = vmatpush.msra.mxu0 0.0
    %1201 = vmatpush.msra.mxu0 0.0
    %1202 = vmatpush.msra.mxu0 0.0
    %1203 = vmatpush.msra.mxu0 0.0
    %1204 = vmatpush.msra.mxu0 0.0
    %1205 = vmatpush.msra.mxu0 0.0
    %1206 = vmatpush.msra.mxu0 0.0
    %1207 = vmatpush.msra.mxu0 0.0
    %1208 = vmatpush.msra.mxu0 %v142
    %1209 = vmatmul.f32.gmra.mxu0 %v1191
    %v1210 = vpop.f32.mrf.mxu0
    %v1211 = vadd.f32 %v140, %v1210
    %1212 = vdwg.mxu0
    %v1213 = vperm.slane %v1189, 0
    %v1214 = vadd.f32 %v1211, %v1213
    %v1215 = vmin.f32 %v1214, 20.0
    %v1216 = vmul.f32 %v1215, 1.442695
    %v1217 = vpow.pop %v1216
    %v1218 = vadd.f32 %v1217, 2.0
    %v1219 = vmul.f32 %v1217, %v1218
    %v1220 = vmul.f32 %v1214, %v1219
    %v1221 = vadd.f32 %v1219, 2.0
    %v1222 = vrcp.pop %v1221
    %v1223 = vmul.f32 %v1220, %v1222
    %v1225 = vsel %vm216, %v1223, 0
    %1227 = vmatpush.msra.mxu0 0.0
    %1228 = vmatpush.msra.mxu0 0.0
    %1229 = vmatpush.msra.mxu0 0.0
    %1230 = vmatpush.msra.mxu0 0.0
    %1231 = vmatpush.msra.mxu0 0.0
    %1232 = vmatpush.msra.mxu0 0.0
    %1233 = vmatpush.msra.mxu0 0.0
    %1234 = vmatpush.msra.mxu0 0.0
    %1235 = vmatpush.msra.mxu0 %v150
    %1236 = vmatpush.msra.mxu0 %v149
    %1237 = vmatpush.msra.mxu0 %v148
    %1238 = vmatpush.msra.mxu0 %v147
    %1239 = vmatpush.msra.mxu0 %v146
    %1240 = vmatpush.msra.mxu0 %v145
    %1241 = vmatpush.msra.mxu0 %v144
    %1242 = vmatpush.msra.mxu0 %v143
    %1243 = vmatmul.f32.gmra.mxu0 %v1225
    %v1244 = vpop.f32.mrf.mxu0
    %v1245 = vadd.f32 %v169, %v1244
    %1246 = vdwg.mxu0
    %v1247 = vmin.f32 %v1245, 20.0
    %v1248 = vmul.f32 %v1247, 1.442695
    %v1249 = vpow.pop %v1248
    %v1250 = vadd.f32 %v1249, 2.0
    %v1251 = vmul.f32 %v1249, %v1250
    %v1252 = vmul.f32 %v1245, %v1251
    %v1253 = vadd.f32 %v1251, 2.0
    %v1254 = vrcp.pop %v1253
    %v1255 = vmul.f32 %v1252, %v1254
    %v1257 = vsel %vm216, %v1255, 0
    %1259 = vmatpush.msra.mxu0 0.0
    %1260 = vmatpush.msra.mxu0 0.0
    %1261 = vmatpush.msra.mxu0 0.0
    %1262 = vmatpush.msra.mxu0 0.0
    %1263 = vmatpush.msra.mxu0 0.0
    %1264 = vmatpush.msra.mxu0 0.0
    %1265 = vmatpush.msra.mxu0 0.0
    %1266 = vmatpush.msra.mxu0 0.0
    %1267 = vmatpush.msra.mxu0 %v158
    %1268 = vmatpush.msra.mxu0 %v157
    %1269 = vmatpush.msra.mxu0 %v156
    %1270 = vmatpush.msra.mxu0 %v155
    %1271 = vmatpush.msra.mxu0 %v154
    %1272 = vmatpush.msra.mxu0 %v153
    %1273 = vmatpush.msra.mxu0 %v152
    %1274 = vmatpush.msra.mxu0 %v151
    %1275 = vmatmul.f32.gmra.mxu0 %v1257
    %v1276 = vpop.f32.mrf.mxu0
    %v1277 = vadd.f32 %v173, %v1276
    %1278 = vdwg.mxu0
    %v1279 = vmin.f32 %v1277, 20.0
    %v1280 = vmul.f32 %v1279, 1.442695
    %v1281 = vpow.pop %v1280
    %v1282 = vadd.f32 %v1281, 2.0
    %v1283 = vmul.f32 %v1281, %v1282
    %v1284 = vmul.f32 %v1277, %v1283
    %v1285 = vadd.f32 %v1283, 2.0
    %v1286 = vrcp.pop %v1285
    %v1287 = vmul.f32 %v1284, %v1286
    %v1289 = vsel %vm216, %v1287, 0
    %1291 = vmatpush.msra.mxu0 0.0
    %1292 = vmatpush.msra.mxu0 0.0
    %1293 = vmatpush.msra.mxu0 0.0
    %1294 = vmatpush.msra.mxu0 0.0
    %1295 = vmatpush.msra.mxu0 0.0
    %1296 = vmatpush.msra.mxu0 0.0
    %1297 = vmatpush.msra.mxu0 0.0
    %1298 = vmatpush.msra.mxu0 0.0
    %1299 = vmatpush.msra.mxu0 %v166
    %1300 = vmatpush.msra.mxu0 %v165
    %1301 = vmatpush.msra.mxu0 %v164
    %1302 = vmatpush.msra.mxu0 %v163
    %1303 = vmatpush.msra.mxu0 %v162
    %1304 = vmatpush.msra.mxu0 %v161
    %1305 = vmatpush.msra.mxu0 %v160
    %1306 = vmatpush.msra.mxu0 %v159
    %1307 = vmatmul.f32.gmra.mxu0 %v1289
    %v1308 = vpop.f32.mrf.mxu0
    %v1309 = vadd.f32 %v177, %v1308
    %1310 = vdwg.mxu0
    %s1311 = sld [smem:[#allocation2 + $0x23]]
    %s1312 = sld [smem:[#allocation2 + $0x24]]
    %s1313 = sld [smem:[#allocation2 + $0x25]]
    %s1314 = sld [smem:[#allocation2 + $0x26]]
    %s1315 = sld [smem:[#allocation2 + $0x27]]
    %v1316 = vstv %s1311
    %v1317 = vmul.f32 %v1316, %v1188
    %v1318 = vstv %s1312
    %v1319 = vmul.f32 %v1318, %v1309
    %v1320 = vsub.f32 %v1317, %v1319
    %v1321 = vmax.f32 %v1320, -1.0
    %v1322 = vmin.f32 %v1321, 1.0
    %v1323 = vstv %s1313
    %v1324 = vmul.f32 %v1323, %v1322
    %v1325 = vstv %s1314
    %v1326 = vmul.f32 %v1325, %v1188
    %v1327 = vadd.f32 %v1324, %v1326
    %s1328 = scalar_lea.vmem %s3, 56
    %v1329 = vld [vmem:[%s1328] sm:$0xff]
    %v1330 = vstv %s1315
    %v1331 = vmul.f32 %v1330, %v1329
    %v1332 = vadd.f32 %v1327, %v1331
    %v1333 = vld [vmem:[%s4 + $0x8] sm:$0x1]
    %v1335 = vsel %vm181, %v1332, 0
    %1337 = vmatpush.msra.mxu0 0.0
    %1338 = vmatpush.msra.mxu0 0.0
    %1339 = vmatpush.msra.mxu0 0.0
    %1340 = vmatpush.msra.mxu0 0.0
    %1341 = vmatpush.msra.mxu0 0.0
    %1342 = vmatpush.msra.mxu0 0.0
    %1343 = vmatpush.msra.mxu0 0.0
    %1344 = vmatpush.msra.mxu0 0.0
    %1345 = vmatpush.msra.mxu0 0.0
    %1346 = vmatpush.msra.mxu0 0.0
    %1347 = vmatpush.msra.mxu0 0.0
    %1348 = vmatpush.msra.mxu0 0.0
    %1349 = vmatpush.msra.mxu0 0.0
    %1350 = vmatpush.msra.mxu0 0.0
    %1351 = vmatpush.msra.mxu0 0.0
    %1352 = vmatpush.msra.mxu0 %v142
    %1353 = vmatmul.f32.gmra.mxu0 %v1335
    %v1354 = vpop.f32.mrf.mxu0
    %v1355 = vadd.f32 %v140, %v1354
    %1356 = vdwg.mxu0
    %v1357 = vperm.slane %v1333, 0
    %v1358 = vadd.f32 %v1355, %v1357
    %v1359 = vmin.f32 %v1358, 20.0
    %v1360 = vmul.f32 %v1359, 1.442695
    %v1361 = vpow.pop %v1360
    %v1362 = vadd.f32 %v1361, 2.0
    %v1363 = vmul.f32 %v1361, %v1362
    %v1364 = vmul.f32 %v1358, %v1363
    %v1365 = vadd.f32 %v1363, 2.0
    %v1366 = vrcp.pop %v1365
    %v1367 = vmul.f32 %v1364, %v1366
    %v1369 = vsel %vm216, %v1367, 0
    %1371 = vmatpush.msra.mxu0 0.0
    %1372 = vmatpush.msra.mxu0 0.0
    %1373 = vmatpush.msra.mxu0 0.0
    %1374 = vmatpush.msra.mxu0 0.0
    %1375 = vmatpush.msra.mxu0 0.0
    %1376 = vmatpush.msra.mxu0 0.0
    %1377 = vmatpush.msra.mxu0 0.0
    %1378 = vmatpush.msra.mxu0 0.0
    %1379 = vmatpush.msra.mxu0 %v150
    %1380 = vmatpush.msra.mxu0 %v149
    %1381 = vmatpush.msra.mxu0 %v148
    %1382 = vmatpush.msra.mxu0 %v147
    %1383 = vmatpush.msra.mxu0 %v146
    %1384 = vmatpush.msra.mxu0 %v145
    %1385 = vmatpush.msra.mxu0 %v144
    %1386 = vmatpush.msra.mxu0 %v143
    %1387 = vmatmul.f32.gmra.mxu0 %v1369
    %v1388 = vpop.f32.mrf.mxu0
    %v1389 = vadd.f32 %v169, %v1388
    %1390 = vdwg.mxu0
    %v1391 = vmin.f32 %v1389, 20.0
    %v1392 = vmul.f32 %v1391, 1.442695
    %v1393 = vpow.pop %v1392
    %v1394 = vadd.f32 %v1393, 2.0
    %v1395 = vmul.f32 %v1393, %v1394
    %v1396 = vmul.f32 %v1389, %v1395
    %v1397 = vadd.f32 %v1395, 2.0
    %v1398 = vrcp.pop %v1397
    %v1399 = vmul.f32 %v1396, %v1398
    %v1401 = vsel %vm216, %v1399, 0
    %1403 = vmatpush.msra.mxu0 0.0
    %1404 = vmatpush.msra.mxu0 0.0
    %1405 = vmatpush.msra.mxu0 0.0
    %1406 = vmatpush.msra.mxu0 0.0
    %1407 = vmatpush.msra.mxu0 0.0
    %1408 = vmatpush.msra.mxu0 0.0
    %1409 = vmatpush.msra.mxu0 0.0
    %1410 = vmatpush.msra.mxu0 0.0
    %1411 = vmatpush.msra.mxu0 %v158
    %1412 = vmatpush.msra.mxu0 %v157
    %1413 = vmatpush.msra.mxu0 %v156
    %1414 = vmatpush.msra.mxu0 %v155
    %1415 = vmatpush.msra.mxu0 %v154
    %1416 = vmatpush.msra.mxu0 %v153
    %1417 = vmatpush.msra.mxu0 %v152
    %1418 = vmatpush.msra.mxu0 %v151
    %1419 = vmatmul.f32.gmra.mxu0 %v1401
    %v1420 = vpop.f32.mrf.mxu0
    %v1421 = vadd.f32 %v173, %v1420
    %1422 = vdwg.mxu0
    %v1423 = vmin.f32 %v1421, 20.0
    %v1424 = vmul.f32 %v1423, 1.442695
    %v1425 = vpow.pop %v1424
    %v1426 = vadd.f32 %v1425, 2.0
    %v1427 = vmul.f32 %v1425, %v1426
    %v1428 = vmul.f32 %v1421, %v1427
    %v1429 = vadd.f32 %v1427, 2.0
    %v1430 = vrcp.pop %v1429
    %v1431 = vmul.f32 %v1428, %v1430
    %v1433 = vsel %vm216, %v1431, 0
    %1435 = vmatpush.msra.mxu0 0.0
    %1436 = vmatpush.msra.mxu0 0.0
    %1437 = vmatpush.msra.mxu0 0.0
    %1438 = vmatpush.msra.mxu0 0.0
    %1439 = vmatpush.msra.mxu0 0.0
    %1440 = vmatpush.msra.mxu0 0.0
    %1441 = vmatpush.msra.mxu0 0.0
    %1442 = vmatpush.msra.mxu0 0.0
    %1443 = vmatpush.msra.mxu0 %v166
    %1444 = vmatpush.msra.mxu0 %v165
    %1445 = vmatpush.msra.mxu0 %v164
    %1446 = vmatpush.msra.mxu0 %v163
    %1447 = vmatpush.msra.mxu0 %v162
    %1448 = vmatpush.msra.mxu0 %v161
    %1449 = vmatpush.msra.mxu0 %v160
    %1450 = vmatpush.msra.mxu0 %v159
    %1451 = vmatmul.f32.gmra.mxu0 %v1433
    %v1452 = vpop.f32.mrf.mxu0
    %v1453 = vadd.f32 %v177, %v1452
    %1454 = vdwg.mxu0
    %s1455 = sld [smem:[#allocation2 + $0x28]]
    %s1456 = sld [smem:[#allocation2 + $0x29]]
    %s1457 = sld [smem:[#allocation2 + $0x2a]]
    %s1458 = sld [smem:[#allocation2 + $0x2b]]
    %s1459 = sld [smem:[#allocation2 + $0x2c]]
    %v1460 = vstv %s1455
    %v1461 = vmul.f32 %v1460, %v1332
    %v1462 = vstv %s1456
    %v1463 = vmul.f32 %v1462, %v1453
    %v1464 = vsub.f32 %v1461, %v1463
    %v1465 = vmax.f32 %v1464, -1.0
    %v1466 = vmin.f32 %v1465, 1.0
    %v1467 = vstv %s1457
    %v1468 = vmul.f32 %v1467, %v1466
    %v1469 = vstv %s1458
    %v1470 = vmul.f32 %v1469, %v1332
    %v1471 = vadd.f32 %v1468, %v1470
    %s1472 = scalar_lea.vmem %s3, 64
    %v1473 = vld [vmem:[%s1472] sm:$0xff]
    %v1474 = vstv %s1459
    %v1475 = vmul.f32 %v1474, %v1473
    %v1476 = vadd.f32 %v1471, %v1475
    %v1477 = vld [vmem:[%s4 + $0x9] sm:$0x1]
    %v1479 = vsel %vm181, %v1476, 0
    %1481 = vmatpush.msra.mxu0 0.0
    %1482 = vmatpush.msra.mxu0 0.0
    %1483 = vmatpush.msra.mxu0 0.0
    %1484 = vmatpush.msra.mxu0 0.0
    %1485 = vmatpush.msra.mxu0 0.0
    %1486 = vmatpush.msra.mxu0 0.0
    %1487 = vmatpush.msra.mxu0 0.0
    %1488 = vmatpush.msra.mxu0 0.0
    %1489 = vmatpush.msra.mxu0 0.0
    %1490 = vmatpush.msra.mxu0 0.0
    %1491 = vmatpush.msra.mxu0 0.0
    %1492 = vmatpush.msra.mxu0 0.0
    %1493 = vmatpush.msra.mxu0 0.0
    %1494 = vmatpush.msra.mxu0 0.0
    %1495 = vmatpush.msra.mxu0 0.0
    %1496 = vmatpush.msra.mxu0 %v142
    %1497 = vmatmul.f32.gmra.mxu0 %v1479
    %v1498 = vpop.f32.mrf.mxu0
    %v1499 = vadd.f32 %v140, %v1498
    %1500 = vdwg.mxu0
    %v1501 = vperm.slane %v1477, 0
    %v1502 = vadd.f32 %v1499, %v1501
    %v1503 = vmin.f32 %v1502, 20.0
    %v1504 = vmul.f32 %v1503, 1.442695
    %v1505 = vpow.pop %v1504
    %v1506 = vadd.f32 %v1505, 2.0
    %v1507 = vmul.f32 %v1505, %v1506
    %v1508 = vmul.f32 %v1502, %v1507
    %v1509 = vadd.f32 %v1507, 2.0
    %v1510 = vrcp.pop %v1509
    %v1511 = vmul.f32 %v1508, %v1510
    %v1513 = vsel %vm216, %v1511, 0
    %1515 = vmatpush.msra.mxu0 0.0
    %1516 = vmatpush.msra.mxu0 0.0
    %1517 = vmatpush.msra.mxu0 0.0
    %1518 = vmatpush.msra.mxu0 0.0
    %1519 = vmatpush.msra.mxu0 0.0
    %1520 = vmatpush.msra.mxu0 0.0
    %1521 = vmatpush.msra.mxu0 0.0
    %1522 = vmatpush.msra.mxu0 0.0
    %1523 = vmatpush.msra.mxu0 %v150
    %1524 = vmatpush.msra.mxu0 %v149
    %1525 = vmatpush.msra.mxu0 %v148
    %1526 = vmatpush.msra.mxu0 %v147
    %1527 = vmatpush.msra.mxu0 %v146
    %1528 = vmatpush.msra.mxu0 %v145
    %1529 = vmatpush.msra.mxu0 %v144
    %1530 = vmatpush.msra.mxu0 %v143
    %1531 = vmatmul.f32.gmra.mxu0 %v1513
    %v1532 = vpop.f32.mrf.mxu0
    %v1533 = vadd.f32 %v169, %v1532
    %1534 = vdwg.mxu0
    %v1535 = vmin.f32 %v1533, 20.0
    %v1536 = vmul.f32 %v1535, 1.442695
    %v1537 = vpow.pop %v1536
    %v1538 = vadd.f32 %v1537, 2.0
    %v1539 = vmul.f32 %v1537, %v1538
    %v1540 = vmul.f32 %v1533, %v1539
    %v1541 = vadd.f32 %v1539, 2.0
    %v1542 = vrcp.pop %v1541
    %v1543 = vmul.f32 %v1540, %v1542
    %v1545 = vsel %vm216, %v1543, 0
    %1547 = vmatpush.msra.mxu0 0.0
    %1548 = vmatpush.msra.mxu0 0.0
    %1549 = vmatpush.msra.mxu0 0.0
    %1550 = vmatpush.msra.mxu0 0.0
    %1551 = vmatpush.msra.mxu0 0.0
    %1552 = vmatpush.msra.mxu0 0.0
    %1553 = vmatpush.msra.mxu0 0.0
    %1554 = vmatpush.msra.mxu0 0.0
    %1555 = vmatpush.msra.mxu0 %v158
    %1556 = vmatpush.msra.mxu0 %v157
    %1557 = vmatpush.msra.mxu0 %v156
    %1558 = vmatpush.msra.mxu0 %v155
    %1559 = vmatpush.msra.mxu0 %v154
    %1560 = vmatpush.msra.mxu0 %v153
    %1561 = vmatpush.msra.mxu0 %v152
    %1562 = vmatpush.msra.mxu0 %v151
    %1563 = vmatmul.f32.gmra.mxu0 %v1545
    %v1564 = vpop.f32.mrf.mxu0
    %v1565 = vadd.f32 %v173, %v1564
    %1566 = vdwg.mxu0
    %v1567 = vmin.f32 %v1565, 20.0
    %v1568 = vmul.f32 %v1567, 1.442695
    %v1569 = vpow.pop %v1568
    %v1570 = vadd.f32 %v1569, 2.0
    %v1571 = vmul.f32 %v1569, %v1570
    %v1572 = vmul.f32 %v1565, %v1571
    %v1573 = vadd.f32 %v1571, 2.0
    %v1574 = vrcp.pop %v1573
    %v1575 = vmul.f32 %v1572, %v1574
    %v1577 = vsel %vm216, %v1575, 0
    %1579 = vmatpush.msra.mxu0 0.0
    %1580 = vmatpush.msra.mxu0 0.0
    %1581 = vmatpush.msra.mxu0 0.0
    %1582 = vmatpush.msra.mxu0 0.0
    %1583 = vmatpush.msra.mxu0 0.0
    %1584 = vmatpush.msra.mxu0 0.0
    %1585 = vmatpush.msra.mxu0 0.0
    %1586 = vmatpush.msra.mxu0 0.0
    %1587 = vmatpush.msra.mxu0 %v166
    %1588 = vmatpush.msra.mxu0 %v165
    %1589 = vmatpush.msra.mxu0 %v164
    %1590 = vmatpush.msra.mxu0 %v163
    %1591 = vmatpush.msra.mxu0 %v162
    %1592 = vmatpush.msra.mxu0 %v161
    %1593 = vmatpush.msra.mxu0 %v160
    %1594 = vmatpush.msra.mxu0 %v159
    %1595 = vmatmul.f32.gmra.mxu0 %v1577
    %v1596 = vpop.f32.mrf.mxu0
    %v1597 = vadd.f32 %v177, %v1596
    %1598 = vdwg.mxu0
    %s1599 = sld [smem:[#allocation2 + $0x2d]]
    %s1600 = sld [smem:[#allocation2 + $0x2e]]
    %s1601 = sld [smem:[#allocation2 + $0x2f]]
    %s1602 = sld [smem:[#allocation2 + $0x30]]
    %s1603 = sld [smem:[#allocation2 + $0x31]]
    %v1604 = vstv %s1599
    %v1605 = vmul.f32 %v1604, %v1476
    %v1606 = vstv %s1600
    %v1607 = vmul.f32 %v1606, %v1597
    %v1608 = vsub.f32 %v1605, %v1607
    %v1609 = vmax.f32 %v1608, -1.0
    %v1610 = vmin.f32 %v1609, 1.0
    %v1611 = vstv %s1601
    %v1612 = vmul.f32 %v1611, %v1610
    %v1613 = vstv %s1602
    %v1614 = vmul.f32 %v1613, %v1476
    %v1615 = vadd.f32 %v1612, %v1614
    %s1616 = scalar_lea.vmem %s3, 72
    %v1617 = vld [vmem:[%s1616] sm:$0xff]
    %v1618 = vstv %s1603
    %v1619 = vmul.f32 %v1618, %v1617
    %v1620 = vadd.f32 %v1615, %v1619
    %v1621 = vmax.f32 %v1620, -1.0
    %v1622 = vmin.f32 %v1621, 1.0
    %1623 = vst.msk [vmem:[#allocation12] sm:$0xff] %vm181, %v1622
    // Predicated region
    $region74: #{tpu_custom_call.1} parent=1 // pred_check
      _
    $region75: #{tpu_custom_call.1} parent=1 // pred_check_branch
      %1625 = sbr.rel (0) target = $region77
    $region76: #{tpu_custom_call.1} parent=1 // pred_region
      %1627 = vsyncadd [#allocation4], 0
      %s1629 = sshll.u32 [#allocation12], 4
      %s1630 = int_to_ptr.vmem [resolvable:$true] %s1629
      %s1631 = sshll.u32 %s13, 4
      %s1632 = int_to_ptr.hbm [resolvable:$true] %s1631
      %1634 = dma.vmem_to_hbm [thread:$0]  %s1630, 128, %s1632, [#allocation4]
    $region77: #{tpu_custom_call.1} parent=1 // pred_fallthru
      _
    // Predicated region
    $region78: #{tpu_custom_call.1} parent=1 // pred_check
      _
    $region79: #{tpu_custom_call.1} parent=1 // pred_check_branch
      %1636 = sbr.rel (0) target = $region81
    $region80: #{tpu_custom_call.1} parent=1 // pred_region
      %1638 = dma.done [#allocation4], 128
    $region81: #{tpu_custom_call.1} parent=1 // pred_fallthru
      _
    %1639 = vsyncpa [#allocation3], 1
    %1640 = vsyncpa [#allocation8], 1
    %1641 = vsyncpa [#allocation11], 1
    %1642 = vsyncpa [#allocation4], 1
    %1643 = vsyncpa [#allocation5], 1

</llo_original>
